<compile_context>
chip_gen: v7x
topology: tpu7x:2x2x1
jax: 0.10.0
libtpu: 0.0.40
codegen_flags: <defaults>
</compile_context>

<pallas_src>
import jax
import jax.numpy as jnp
from jax.experimental import pallas as pl
from jax.experimental.pallas import tpu as pltpu

BN_EPS = 1e-5
LRELU_SLOPE = 0.2
K = 4          # conv kernel size
K_PAD = 8      # conv0 taps zero-padded to 8 columns -> clean (rows,8)x(8,32) matmul
STRIDE = 2
PAD = 1
SUBLANE = 8
FUSED_VMEM_CAP = 24 * 1024 * 1024   # stay well under the 32 MiB scoped limit


def _round_up(v, m):
    return -(-v // m) * m


# ---------------------------------------------------------------------------
# JAX-side glue: conv0 tap matrix (tiny; one fused XLA op)
# ---------------------------------------------------------------------------
def _build_conv0_taps(x, n, l, npad):
    """x: (N,1,L) -> (L/2 * Npad, K_PAD) tap matrix, row index = m*Npad + n.

    Column k (< K) holds x_pad[n, 2m + k] for the stride-2 / pad-1 conv; the
    last K_PAD-K columns are zero.  Padded batch rows are zero so they
    contribute nothing to the conv output or the BN sums.
    """
    l0 = l // 2
    x2 = x.reshape(n, l)
    xp = jnp.pad(x2, ((0, npad - n), (PAD, PAD)))            # (Npad, L+2)
    cols = [xp[:, k:k + STRIDE * l0:STRIDE] for k in range(K)]   # each (Npad, L/2)
    t = jnp.stack(cols, axis=-1)                              # (Npad, L/2, K)
    t = jnp.transpose(t, (1, 0, 2)).reshape(l0 * npad, K)     # row = m*Npad + n
    return jnp.pad(t, ((0, 0), (0, K_PAD - K)))               # (L/2*Npad, 8)


def _fused_vmem_bytes(npad, l, latent):
    """Rough upper bound on the fused kernel's VMEM working set."""
    l0, l1, l2 = l // 2, l // 4, l // 8
    acts = 4 * npad * (l0 * (K_PAD + 32 + 4 * 32)
                       + l1 * (64 + 4 * 64)
                       + l2 * (128 + 2 * latent))
    wts = 4 * K_PAD * 32 + 2 * (K * 32 * 64 + K * 64 * 128
                                + 128 * l2 * 2 * latent)
    return 2 * (acts + wts)      # 2x headroom for live temporaries


# ---------------------------------------------------------------------------
# Fused encoder kernel (whole forward pass, single invocation, no grid)
# ---------------------------------------------------------------------------
def _make_encoder_kernel(n_real, npad, l0, latent):
    l1, l2 = l0 // 2, l0 // 4

    def kernel(t0_ref, w0_ref, g0_ref, b0_ref,
               w1_ref, g1_ref, b1_ref,
               w2_ref, g2_ref, b2_ref,
               fcw_ref, fcb_ref, out_ref):

        def bn_lrelu(y, gamma, beta, rows_real):
            # Training-mode BatchNorm (biased variance) + LeakyReLU(0.2).
            # Padded batch rows of y are exactly zero, so dividing the raw
            # sums by the REAL row count gives the exact batch statistics.
            inv = 1.0 / float(rows_real)
            s = jnp.sum(y, axis=0, keepdims=True) * inv           # (1, C) mean
            q = jnp.sum(y * y, axis=0, keepdims=True) * inv       # (1, C) E[y^2]
            var = jnp.maximum(q - s * s, 0.0)
            scale = gamma * jax.lax.rsqrt(var + BN_EPS)
            shift = beta - scale * s
            z = y * scale + shift
            return jnp.where(z >= 0.0, z, LRELU_SLOPE * z)

        def patches(a, m_in):
            """In-kernel im2col for the next stride-2 / k=4 / pad=1 conv.

            a: (m_in*Npad, C) post-activation, row = m*Npad + n.
            Returns (m_in/2 * Npad, 4C); column order = k*C + c (k-major),
            matching the conv weight layout.  Halo padding is an exact
            post-activation zero; padded batch rows are masked to zero here so
            the next conv's output (and BN sums) stay exact.
            """
            mo = m_in // 2
            c = a.shape[-1]
            a3 = a.reshape(mo, 2 * npad, c)          # sublane split at 16 (tile aligned)
            even = a3[:, :npad, :]                   # position 2j
            odd = a3[:, npad:, :]                    # position 2j+1
            if n_real != npad:
                nmask = jax.lax.broadcasted_iota(jnp.int32, (mo, npad, c), 1) < n_real
                even = jnp.where(nmask, even, 0.0)
                odd = jnp.where(nmask, odd, 0.0)
            zrow = jnp.zeros((1, npad, c), jnp.float32)
            tap0 = jnp.concatenate([zrow, odd[:mo - 1]], axis=0)    # position 2j-1
            tap3 = jnp.concatenate([even[1:], zrow], axis=0)        # position 2j+2
            p = jnp.concatenate([tap0, even, odd, tap3], axis=-1)   # (mo, Npad, 4C)
            return p.reshape(mo * npad, 4 * c)

        # ---- conv0: Conv1d(1->32), taps padded to K=8, f32 matmul ----
        y0 = jnp.dot(t0_ref[...], w0_ref[...], preferred_element_type=jnp.float32)
        a0 = bn_lrelu(y0, g0_ref[...], b0_ref[...], n_real * l0)

        # ---- conv1: Conv1d(32->64), bf16 MXU operands, f32 accumulate ----
        p1 = patches(a0, l0).astype(jnp.bfloat16)
        y1 = jnp.dot(p1, w1_ref[...], preferred_element_type=jnp.float32)
        a1 = bn_lrelu(y1, g1_ref[...], b1_ref[...], n_real * l1)

        # ---- conv2: Conv1d(64->128) ----
        p2 = patches(a1, l1).astype(jnp.bfloat16)
        y2 = jnp.dot(p2, w2_ref[...], preferred_element_type=jnp.float32)
        a2 = bn_lrelu(y2, g2_ref[...], b2_ref[...], n_real * l2)

        # ---- heads: single merged [fc_mean | fc_log_var] contraction ----
        # out[n, d] = sum_l a2[l*Npad+n, :] @ fc_w[l*128:(l+1)*128, d]
        a2b = a2.reshape(l2, npad, 128).astype(jnp.bfloat16)
        wfb = fcw_ref[...].reshape(l2, 128, 2 * latent)
        part = jax.lax.dot_general(a2b, wfb, (((2,), (1,)), ((0,), (0,))),
                                   preferred_element_type=jnp.float32)
        out_ref[...] = jnp.sum(part, axis=0) + fcb_ref[...]

    return kernel


# ---------------------------------------------------------------------------
# Forward
# ---------------------------------------------------------------------------
@jax.jit
def encoder_forward(params, x):
    """x: (N, 1, L) float32 -> (mean, log_var), each (N, latent_dim)."""
    n, cin, l = x.shape
    assert cin == 1, "Encoder expects a single input channel"
    assert l % 8 == 0, "input_length must be divisible by 8 (three stride-2 convs)"
    npad = _round_up(n, SUBLANE)
    l0 = l // 2
    latent = params["fc_b"].shape[-1] // 2

    if _fused_vmem_bytes(npad, l, latent) > FUSED_VMEM_CAP:
        # TODO(synk): tiled multi-pallas_call path for working sets > ~24 MiB.
        raise NotImplementedError("fused encoder kernel requires the working "
                                  "set to fit in VMEM")

    t0 = _build_conv0_taps(x, n, l, npad)
    kernel = _make_encoder_kernel(n, npad, l0, latent)

    vmem_spec = pl.BlockSpec(memory_space=pltpu.MemorySpace.VMEM)
    out = pl.pallas_call(
        kernel,
        out_shape=jax.ShapeDtypeStruct((npad, 2 * latent), jnp.float32),
        in_specs=[vmem_spec] * 12,
        out_specs=vmem_spec,
        compiler_params=pltpu.CompilerParams(
            vmem_limit_bytes=32 * 1024 * 1024),
    )(t0,
      params["conv0_w"], params["bn0_gamma"], params["bn0_beta"],
      params["conv1_w"], params["bn1_gamma"], params["bn1_beta"],
      params["conv2_w"], params["bn2_gamma"], params["bn2_beta"],
      params["fc_w"], params["fc_b"])

    return out[:n, :latent], out[:n, latent:]


# ---------------------------------------------------------------------------
# Parameters
# ---------------------------------------------------------------------------
def init_params(key, input_length, latent_dim):
    l2 = input_length // 8
    flat = 128 * l2
    ks = jax.random.split(key, 11)
    p = {}
    # conv0 weight: (K_PAD, 32); rows K..K_PAD-1 are zero padding.
    w0 = 0.05 * jax.random.normal(ks[0], (K, 32), jnp.float32)
    p["conv0_w"] = jnp.concatenate([w0, jnp.zeros((K_PAD - K, 32), jnp.float32)], 0)
    p["bn0_gamma"] = 1.0 + 0.05 * jax.random.normal(ks[1], (1, 32), jnp.float32)
    p["bn0_beta"] = 0.05 * jax.random.normal(ks[2], (1, 32), jnp.float32)
    # conv1/conv2 weights: (K*Cin, Cout), row = k*Cin + ci (== PyTorch
    # (Cout,Cin,K) permuted), stored bf16 for the MXU.  Conv biases omitted:
    # exactly cancelled by training-mode BatchNorm's mean subtraction.
    p["conv1_w"] = (0.05 * jax.random.normal(ks[3], (K * 32, 64), jnp.float32)
                    ).astype(jnp.bfloat16)
    p["bn1_gamma"] = 1.0 + 0.05 * jax.random.normal(ks[4], (1, 64), jnp.float32)
    p["bn1_beta"] = 0.05 * jax.random.normal(ks[5], (1, 64), jnp.float32)
    p["conv2_w"] = (0.05 * jax.random.normal(ks[6], (K * 64, 128), jnp.float32)
                    ).astype(jnp.bfloat16)
    p["bn2_gamma"] = 1.0 + 0.05 * jax.random.normal(ks[7], (1, 128), jnp.float32)
    p["bn2_beta"] = 0.05 * jax.random.normal(ks[8], (1, 128), jnp.float32)
    # fc_mean / fc_log_var merged into one (F, 2D) weight; rows are in
    # channel-last flatten order (index = l*128 + c): the PyTorch flatten
    # permutation is folded into the weight layout at init time.
    p["fc_w"] = (0.02 * jax.random.normal(ks[9], (flat, 2 * latent_dim), jnp.float32)
                 ).astype(jnp.bfloat16)
    p["fc_b"] = 0.02 * jax.random.normal(ks[10], (1, 2 * latent_dim), jnp.float32)
    return p


# ---------------------------------------------------------------------------
# Pure-JAX reference (f32, training-mode BatchNorm) for self-verification
# ---------------------------------------------------------------------------
def reference_forward(params, x):
    n = x.shape[0]

    def conv1d(h, w_mat, cin):
        w_mat = w_mat.astype(jnp.float32)[:K * cin]
        cout = w_mat.shape[1]
        w = w_mat.reshape(K, cin, cout).transpose(2, 1, 0)      # (Cout, Cin, K)
        return jax.lax.conv_general_dilated(
            h, w, window_strides=(STRIDE,), padding=[(PAD, PAD)],
            dimension_numbers=("NCH", "OIH", "NCH"),
            precision=jax.lax.Precision.HIGHEST)

    def bn_lrelu(y, gamma, beta):
        mu = jnp.mean(y, axis=(0, 2), keepdims=True)
        var = jnp.mean((y - mu) ** 2, axis=(0, 2), keepdims=True)
        z = (y - mu) * jax.lax.rsqrt(var + BN_EPS)
        z = gamma.reshape(1, -1, 1) * z + beta.reshape(1, -1, 1)
        return jnp.where(z >= 0.0, z, LRELU_SLOPE * z)

    h = x
    h = bn_lrelu(conv1d(h, params["conv0_w"], 1), params["bn0_gamma"], params["bn0_beta"])
    h = bn_lrelu(conv1d(h, params["conv1_w"], 32), params["bn1_gamma"], params["bn1_beta"])
    h = bn_lrelu(conv1d(h, params["conv2_w"], 64), params["bn2_gamma"], params["bn2_beta"])
    flat = h.transpose(0, 2, 1).reshape(n, -1)     # channel-last flatten == fc_w row order
    out = jnp.dot(flat, params["fc_w"].astype(jnp.float32),
                  precision=jax.lax.Precision.HIGHEST) + params["fc_b"]
    d = params["fc_b"].shape[-1] // 2
    return out[:, :d], out[:, d:]


if __name__ == "__main__":
    INPUT_LENGTH = 64    # must be divisible by 8
    LATENT_DIM = 16
    BATCH = 4            # deliberately not a multiple of 8: exercises batch padding

    key = jax.random.PRNGKey(0)
    k_params, k_x = jax.random.split(key)
    params = init_params(k_params, INPUT_LENGTH, LATENT_DIM)
    x = jax.random.normal(k_x, (BATCH, 1, INPUT_LENGTH), jnp.float32)

    mean, log_var = encoder_forward(params, x)
    jax.block_until_ready((mean, log_var))

    assert mean.shape == (BATCH, LATENT_DIM)
    assert log_var.shape == (BATCH, LATENT_DIM)
    assert bool(jnp.all(jnp.isfinite(mean))) and bool(jnp.all(jnp.isfinite(log_var)))

    # Correctness vs a pure-JAX f32 reference (tolerance covers the bf16
    # matmul operands in the kernel).
    ref_mean, ref_log_var = reference_forward(params, x)
    err = max(float(jnp.max(jnp.abs(mean - ref_mean))),
              float(jnp.max(jnp.abs(log_var - ref_log_var))))
    assert err < 2e-2, f"mismatch vs reference: {err}"

    print("KERNEL_OK")
</pallas_src>

<mosaic_0001>
module attributes {stable_mosaic.version = 11 : i64} {
  func.func @kernel(%arg0: memref<256x8xf32, #tpu.memory_space<vmem>>, %arg1: memref<8x32xf32, #tpu.memory_space<vmem>>, %arg2: memref<1x32xf32, #tpu.memory_space<vmem>>, %arg3: memref<1x32xf32, #tpu.memory_space<vmem>>, %arg4: memref<128x64xbf16, #tpu.memory_space<vmem>>, %arg5: memref<1x64xf32, #tpu.memory_space<vmem>>, %arg6: memref<1x64xf32, #tpu.memory_space<vmem>>, %arg7: memref<256x128xbf16, #tpu.memory_space<vmem>>, %arg8: memref<1x128xf32, #tpu.memory_space<vmem>>, %arg9: memref<1x128xf32, #tpu.memory_space<vmem>>, %arg10: memref<1024x32xbf16, #tpu.memory_space<vmem>>, %arg11: memref<1x32xf32, #tpu.memory_space<vmem>>, %arg12: memref<8x32xf32, #tpu.memory_space<vmem>>) attributes {dimension_semantics = [], scalar_prefetch = 0 : i64, scratch_operands = 0 : i64, tpu.core_type = #tpu.core_type<tc>} {
    %c0 = arith.constant 0 : index
    %c0_0 = arith.constant 0 : index
    %0 = vector.load %arg0[%c0, %c0_0] : memref<256x8xf32, #tpu.memory_space<vmem>>, vector<256x8xf32>
    %c0_1 = arith.constant 0 : index
    %c0_2 = arith.constant 0 : index
    %1 = vector.load %arg1[%c0_1, %c0_2] : memref<8x32xf32, #tpu.memory_space<vmem>>, vector<8x32xf32>
    %cst = arith.constant dense<0.000000e+00> : vector<256x32xf32>
    %2 = tpu.matmul %0, %1, %cst {dimension_numbers = #tpu.dot_dimension_numbers<[1], [0], [0], [1], [0, 0, 1, 1], [], []>} : vector<256x8xf32>, vector<8x32xf32>, vector<256x32xf32> -> vector<256x32xf32>
    %c0_3 = arith.constant 0 : index
    %c0_4 = arith.constant 0 : index
    %3 = vector.load %arg2[%c0_3, %c0_4] : memref<1x32xf32, #tpu.memory_space<vmem>>, vector<1x32xf32>
    %c0_5 = arith.constant 0 : index
    %c0_6 = arith.constant 0 : index
    %4 = vector.load %arg3[%c0_5, %c0_6] : memref<1x32xf32, #tpu.memory_space<vmem>>, vector<1x32xf32>
    %cst_7 = arith.constant dense<0.000000e+00> : vector<32xf32>
    %5 = vector.multi_reduction <add>, %2, %cst_7 [0] : vector<256x32xf32> to vector<32xf32>
    %6 = vector.shape_cast %5 : vector<32xf32> to vector<1x32xf32>
    %cst_8 = arith.constant 7.812500e-03 : f32
    %7 = vector.broadcast %cst_8 : f32 to vector<1x32xf32>
    %8 = arith.mulf %6, %7 : vector<1x32xf32>
    %9 = arith.mulf %2, %2 : vector<256x32xf32>
    %cst_9 = arith.constant dense<0.000000e+00> : vector<32xf32>
    %10 = vector.multi_reduction <add>, %9, %cst_9 [0] : vector<256x32xf32> to vector<32xf32>
    %11 = vector.shape_cast %10 : vector<32xf32> to vector<1x32xf32>
    %cst_10 = arith.constant 7.812500e-03 : f32
    %12 = vector.broadcast %cst_10 : f32 to vector<1x32xf32>
    %13 = arith.mulf %11, %12 : vector<1x32xf32>
    %14 = arith.mulf %8, %8 : vector<1x32xf32>
    %15 = arith.subf %13, %14 : vector<1x32xf32>
    %cst_11 = arith.constant 0.000000e+00 : f32
    %16 = vector.broadcast %cst_11 : f32 to vector<1x32xf32>
    %17 = arith.maximumf %15, %16 : vector<1x32xf32>
    %cst_12 = arith.constant 9.99999974E-6 : f32
    %18 = vector.broadcast %cst_12 : f32 to vector<1x32xf32>
    %19 = arith.addf %17, %18 : vector<1x32xf32>
    %20 = math.rsqrt %19 : vector<1x32xf32>
    %21 = arith.mulf %3, %20 : vector<1x32xf32>
    %22 = arith.mulf %21, %8 : vector<1x32xf32>
    %23 = arith.subf %4, %22 : vector<1x32xf32>
    %24 = vector.broadcast %21 : vector<1x32xf32> to vector<256x32xf32>
    %25 = arith.mulf %2, %24 : vector<256x32xf32>
    %26 = vector.broadcast %23 : vector<1x32xf32> to vector<256x32xf32>
    %27 = arith.addf %25, %26 : vector<256x32xf32>
    %cst_13 = arith.constant 0.000000e+00 : f32
    %28 = vector.broadcast %cst_13 : f32 to vector<256x32xf32>
    %29 = arith.cmpf oge, %27, %28 : vector<256x32xf32>
    %cst_14 = arith.constant 2.000000e-01 : f32
    %30 = vector.broadcast %cst_14 : f32 to vector<256x32xf32>
    %31 = arith.mulf %30, %27 : vector<256x32xf32>
    %32 = arith.select %29, %27, %31 : vector<256x32xi1>, vector<256x32xf32>
    %33 = vector.shape_cast %32 : vector<256x32xf32> to vector<16x16x32xf32>
    %34 = vector.extract_strided_slice %33 {offsets = [0, 0, 0], sizes = [16, 8, 32], strides = [1, 1, 1]} : vector<16x16x32xf32> to vector<16x8x32xf32>
    %35 = vector.extract_strided_slice %33 {offsets = [0, 8, 0], sizes = [16, 8, 32], strides = [1, 1, 1]} : vector<16x16x32xf32> to vector<16x8x32xf32>
    %36 = tpu.iota {dimensions = array<i32: 1>} : vector<16x8x32xi32>
    %c4_i32 = arith.constant 4 : i32
    %37 = vector.broadcast %c4_i32 : i32 to vector<16x8x32xi32>
    %38 = arith.cmpi slt, %36, %37 : vector<16x8x32xi32>
    %cst_15 = arith.constant 0.000000e+00 : f32
    %39 = vector.broadcast %cst_15 : f32 to vector<16x8x32xf32>
    %40 = arith.select %38, %34, %39 : vector<16x8x32xi1>, vector<16x8x32xf32>
    %cst_16 = arith.constant 0.000000e+00 : f32
    %41 = vector.broadcast %cst_16 : f32 to vector<16x8x32xf32>
    %42 = arith.select %38, %35, %41 : vector<16x8x32xi1>, vector<16x8x32xf32>
    %cst_17 = arith.constant 0.000000e+00 : f32
    %43 = vector.broadcast %cst_17 : f32 to vector<1x8x32xf32>
    %44 = vector.extract_strided_slice %42 {offsets = [0, 0, 0], sizes = [15, 8, 32], strides = [1, 1, 1]} : vector<16x8x32xf32> to vector<15x8x32xf32>
    %45 = tpu.concatenate %43, %44 in 0 : vector<1x8x32xf32>, vector<15x8x32xf32> -> vector<16x8x32xf32>
    %46 = vector.extract_strided_slice %40 {offsets = [1, 0, 0], sizes = [15, 8, 32], strides = [1, 1, 1]} : vector<16x8x32xf32> to vector<15x8x32xf32>
    %47 = tpu.concatenate %46, %43 in 0 : vector<15x8x32xf32>, vector<1x8x32xf32> -> vector<16x8x32xf32>
    %48 = tpu.concatenate %45, %40, %42, %47 in 2 : vector<16x8x32xf32>, vector<16x8x32xf32>, vector<16x8x32xf32>, vector<16x8x32xf32> -> vector<16x8x128xf32>
    %49 = vector.shape_cast %48 : vector<16x8x128xf32> to vector<128x128xf32>
    %50 = arith.truncf %49 : vector<128x128xf32> to vector<128x128xbf16>
    %c0_18 = arith.constant 0 : index
    %c0_19 = arith.constant 0 : index
    %51 = vector.load %arg4[%c0_18, %c0_19] : memref<128x64xbf16, #tpu.memory_space<vmem>>, vector<128x64xbf16>
    %cst_20 = arith.constant dense<0.000000e+00> : vector<128x64xf32>
    %52 = tpu.matmul %50, %51, %cst_20 {dimension_numbers = #tpu.dot_dimension_numbers<[1], [0], [0], [1], [0, 0, 1, 1], [], []>} : vector<128x128xbf16>, vector<128x64xbf16>, vector<128x64xf32> -> vector<128x64xf32>
    %c0_21 = arith.constant 0 : index
    %c0_22 = arith.constant 0 : index
    %53 = vector.load %arg5[%c0_21, %c0_22] : memref<1x64xf32, #tpu.memory_space<vmem>>, vector<1x64xf32>
    %c0_23 = arith.constant 0 : index
    %c0_24 = arith.constant 0 : index
    %54 = vector.load %arg6[%c0_23, %c0_24] : memref<1x64xf32, #tpu.memory_space<vmem>>, vector<1x64xf32>
    %cst_25 = arith.constant dense<0.000000e+00> : vector<64xf32>
    %55 = vector.multi_reduction <add>, %52, %cst_25 [0] : vector<128x64xf32> to vector<64xf32>
    %56 = vector.shape_cast %55 : vector<64xf32> to vector<1x64xf32>
    %cst_26 = arith.constant 1.562500e-02 : f32
    %57 = vector.broadcast %cst_26 : f32 to vector<1x64xf32>
    %58 = arith.mulf %56, %57 : vector<1x64xf32>
    %59 = arith.mulf %52, %52 : vector<128x64xf32>
    %cst_27 = arith.constant dense<0.000000e+00> : vector<64xf32>
    %60 = vector.multi_reduction <add>, %59, %cst_27 [0] : vector<128x64xf32> to vector<64xf32>
    %61 = vector.shape_cast %60 : vector<64xf32> to vector<1x64xf32>
    %cst_28 = arith.constant 1.562500e-02 : f32
    %62 = vector.broadcast %cst_28 : f32 to vector<1x64xf32>
    %63 = arith.mulf %61, %62 : vector<1x64xf32>
    %64 = arith.mulf %58, %58 : vector<1x64xf32>
    %65 = arith.subf %63, %64 : vector<1x64xf32>
    %cst_29 = arith.constant 0.000000e+00 : f32
    %66 = vector.broadcast %cst_29 : f32 to vector<1x64xf32>
    %67 = arith.maximumf %65, %66 : vector<1x64xf32>
    %cst_30 = arith.constant 9.99999974E-6 : f32
    %68 = vector.broadcast %cst_30 : f32 to vector<1x64xf32>
    %69 = arith.addf %67, %68 : vector<1x64xf32>
    %70 = math.rsqrt %69 : vector<1x64xf32>
    %71 = arith.mulf %53, %70 : vector<1x64xf32>
    %72 = arith.mulf %71, %58 : vector<1x64xf32>
    %73 = arith.subf %54, %72 : vector<1x64xf32>
    %74 = vector.broadcast %71 : vector<1x64xf32> to vector<128x64xf32>
    %75 = arith.mulf %52, %74 : vector<128x64xf32>
    %76 = vector.broadcast %73 : vector<1x64xf32> to vector<128x64xf32>
    %77 = arith.addf %75, %76 : vector<128x64xf32>
    %cst_31 = arith.constant 0.000000e+00 : f32
    %78 = vector.broadcast %cst_31 : f32 to vector<128x64xf32>
    %79 = arith.cmpf oge, %77, %78 : vector<128x64xf32>
    %cst_32 = arith.constant 2.000000e-01 : f32
    %80 = vector.broadcast %cst_32 : f32 to vector<128x64xf32>
    %81 = arith.mulf %80, %77 : vector<128x64xf32>
    %82 = arith.select %79, %77, %81 : vector<128x64xi1>, vector<128x64xf32>
    %83 = vector.shape_cast %82 : vector<128x64xf32> to vector<8x16x64xf32>
    %84 = vector.extract_strided_slice %83 {offsets = [0, 0, 0], sizes = [8, 8, 64], strides = [1, 1, 1]} : vector<8x16x64xf32> to vector<8x8x64xf32>
    %85 = vector.extract_strided_slice %83 {offsets = [0, 8, 0], sizes = [8, 8, 64], strides = [1, 1, 1]} : vector<8x16x64xf32> to vector<8x8x64xf32>
    %86 = tpu.iota {dimensions = array<i32: 1>} : vector<8x8x64xi32>
    %c4_i32_33 = arith.constant 4 : i32
    %87 = vector.broadcast %c4_i32_33 : i32 to vector<8x8x64xi32>
    %88 = arith.cmpi slt, %86, %87 : vector<8x8x64xi32>
    %cst_34 = arith.constant 0.000000e+00 : f32
    %89 = vector.broadcast %cst_34 : f32 to vector<8x8x64xf32>
    %90 = arith.select %88, %84, %89 : vector<8x8x64xi1>, vector<8x8x64xf32>
    %cst_35 = arith.constant 0.000000e+00 : f32
    %91 = vector.broadcast %cst_35 : f32 to vector<8x8x64xf32>
    %92 = arith.select %88, %85, %91 : vector<8x8x64xi1>, vector<8x8x64xf32>
    %cst_36 = arith.constant 0.000000e+00 : f32
    %93 = vector.broadcast %cst_36 : f32 to vector<1x8x64xf32>
    %94 = vector.extract_strided_slice %92 {offsets = [0, 0, 0], sizes = [7, 8, 64], strides = [1, 1, 1]} : vector<8x8x64xf32> to vector<7x8x64xf32>
    %95 = tpu.concatenate %93, %94 in 0 : vector<1x8x64xf32>, vector<7x8x64xf32> -> vector<8x8x64xf32>
    %96 = vector.extract_strided_slice %90 {offsets = [1, 0, 0], sizes = [7, 8, 64], strides = [1, 1, 1]} : vector<8x8x64xf32> to vector<7x8x64xf32>
    %97 = tpu.concatenate %96, %93 in 0 : vector<7x8x64xf32>, vector<1x8x64xf32> -> vector<8x8x64xf32>
    %98 = tpu.concatenate %95, %90, %92, %97 in 2 : vector<8x8x64xf32>, vector<8x8x64xf32>, vector<8x8x64xf32>, vector<8x8x64xf32> -> vector<8x8x256xf32>
    %99 = vector.shape_cast %98 : vector<8x8x256xf32> to vector<64x256xf32>
    %100 = arith.truncf %99 : vector<64x256xf32> to vector<64x256xbf16>
    %c0_37 = arith.constant 0 : index
    %c0_38 = arith.constant 0 : index
    %101 = vector.load %arg7[%c0_37, %c0_38] : memref<256x128xbf16, #tpu.memory_space<vmem>>, vector<256x128xbf16>
    %cst_39 = arith.constant dense<0.000000e+00> : vector<64x128xf32>
    %102 = tpu.matmul %100, %101, %cst_39 {dimension_numbers = #tpu.dot_dimension_numbers<[1], [0], [0], [1], [0, 0, 1, 1], [], []>} : vector<64x256xbf16>, vector<256x128xbf16>, vector<64x128xf32> -> vector<64x128xf32>
    %c0_40 = arith.constant 0 : index
    %c0_41 = arith.constant 0 : index
    %103 = vector.load %arg8[%c0_40, %c0_41] : memref<1x128xf32, #tpu.memory_space<vmem>>, vector<1x128xf32>
    %c0_42 = arith.constant 0 : index
    %c0_43 = arith.constant 0 : index
    %104 = vector.load %arg9[%c0_42, %c0_43] : memref<1x128xf32, #tpu.memory_space<vmem>>, vector<1x128xf32>
    %cst_44 = arith.constant dense<0.000000e+00> : vector<128xf32>
    %105 = vector.multi_reduction <add>, %102, %cst_44 [0] : vector<64x128xf32> to vector<128xf32>
    %106 = vector.shape_cast %105 : vector<128xf32> to vector<1x128xf32>
    %cst_45 = arith.constant 3.125000e-02 : f32
    %107 = vector.broadcast %cst_45 : f32 to vector<1x128xf32>
    %108 = arith.mulf %106, %107 : vector<1x128xf32>
    %109 = arith.mulf %102, %102 : vector<64x128xf32>
    %cst_46 = arith.constant dense<0.000000e+00> : vector<128xf32>
    %110 = vector.multi_reduction <add>, %109, %cst_46 [0] : vector<64x128xf32> to vector<128xf32>
    %111 = vector.shape_cast %110 : vector<128xf32> to vector<1x128xf32>
    %cst_47 = arith.constant 3.125000e-02 : f32
    %112 = vector.broadcast %cst_47 : f32 to vector<1x128xf32>
    %113 = arith.mulf %111, %112 : vector<1x128xf32>
    %114 = arith.mulf %108, %108 : vector<1x128xf32>
    %115 = arith.subf %113, %114 : vector<1x128xf32>
    %cst_48 = arith.constant 0.000000e+00 : f32
    %116 = vector.broadcast %cst_48 : f32 to vector<1x128xf32>
    %117 = arith.maximumf %115, %116 : vector<1x128xf32>
    %cst_49 = arith.constant 9.99999974E-6 : f32
    %118 = vector.broadcast %cst_49 : f32 to vector<1x128xf32>
    %119 = arith.addf %117, %118 : vector<1x128xf32>
    %120 = math.rsqrt %119 : vector<1x128xf32>
    %121 = arith.mulf %103, %120 : vector<1x128xf32>
    %122 = arith.mulf %121, %108 : vector<1x128xf32>
    %123 = arith.subf %104, %122 : vector<1x128xf32>
    %124 = vector.broadcast %121 : vector<1x128xf32> to vector<64x128xf32>
    %125 = arith.mulf %102, %124 : vector<64x128xf32>
    %126 = vector.broadcast %123 : vector<1x128xf32> to vector<64x128xf32>
    %127 = arith.addf %125, %126 : vector<64x128xf32>
    %cst_50 = arith.constant 0.000000e+00 : f32
    %128 = vector.broadcast %cst_50 : f32 to vector<64x128xf32>
    %129 = arith.cmpf oge, %127, %128 : vector<64x128xf32>
    %cst_51 = arith.constant 2.000000e-01 : f32
    %130 = vector.broadcast %cst_51 : f32 to vector<64x128xf32>
    %131 = arith.mulf %130, %127 : vector<64x128xf32>
    %132 = arith.select %129, %127, %131 : vector<64x128xi1>, vector<64x128xf32>
    %133 = vector.shape_cast %132 : vector<64x128xf32> to vector<8x8x128xf32>
    %134 = arith.truncf %133 : vector<8x8x128xf32> to vector<8x8x128xbf16>
    %c0_52 = arith.constant 0 : index
    %c0_53 = arith.constant 0 : index
    %135 = vector.load %arg10[%c0_52, %c0_53] : memref<1024x32xbf16, #tpu.memory_space<vmem>>, vector<1024x32xbf16>
    %136 = vector.shape_cast %135 : vector<1024x32xbf16> to vector<8x128x32xbf16>
    %cst_54 = arith.constant dense<0.000000e+00> : vector<8x8x32xf32>
    %137 = tpu.matmul %134, %136, %cst_54 {dimension_numbers = #tpu.dot_dimension_numbers<[2], [1], [1], [2], [0, 0, 0, 1, 1, 2], [0], [0]>} : vector<8x8x128xbf16>, vector<8x128x32xbf16>, vector<8x8x32xf32> -> vector<8x8x32xf32>
    %cst_55 = arith.constant dense<0.000000e+00> : vector<8x32xf32>
    %138 = vector.multi_reduction <add>, %137, %cst_55 [0] : vector<8x8x32xf32> to vector<8x32xf32>
    %c0_56 = arith.constant 0 : index
    %c0_57 = arith.constant 0 : index
    %139 = vector.load %arg11[%c0_56, %c0_57] : memref<1x32xf32, #tpu.memory_space<vmem>>, vector<1x32xf32>
    %140 = vector.broadcast %139 : vector<1x32xf32> to vector<8x32xf32>
    %141 = arith.addf %138, %140 : vector<8x32xf32>
    %c0_58 = arith.constant 0 : index
    %c0_59 = arith.constant 0 : index
    %142 = vector.load %arg12[%c0_58, %c0_59] : memref<8x32xf32, #tpu.memory_space<vmem>>, vector<8x32xf32>
    tpu.vector_store %arg12[%c0_58, %c0_59], %141 {strides = array<i32>} : memref<8x32xf32, #tpu.memory_space<vmem>>, vector<8x32xf32>,
    return
  }
}

</mosaic_0001>

<llo_original>
// kernel: encoder_forward.1
$region0: #{encoder_forward.1}
  #allocation0 [shape = 'u32[]', space=smem, size = 0x4, offset = 0x4, fixed_abs, tag = 'smem constant byte address 0x4 - core index']
  #allocation1 [shape = 'u32[144,128]{1,0:T(1,128)}', space=vmem, size = 0x12000, scoped, tag = 'internal scratch']
  %s0 = inlined_call_operand.vmem [shape: f32[256,8], index: 0, kind: input, shape index: {}]
  %s1 = inlined_call_operand.vmem [shape: f32[8,32], index: 1, kind: input, shape index: {}]
  %s2 = inlined_call_operand.vmem [shape: f32[1,32], index: 2, kind: input, shape index: {}]
  %s3 = inlined_call_operand.vmem [shape: f32[1,32], index: 3, kind: input, shape index: {}]
  %s4 = inlined_call_operand.vmem [shape: bf16[128,64], index: 4, kind: input, shape index: {}]
  %s5 = inlined_call_operand.vmem [shape: f32[1,64], index: 5, kind: input, shape index: {}]
  %s6 = inlined_call_operand.vmem [shape: f32[1,64], index: 6, kind: input, shape index: {}]
  %s7 = inlined_call_operand.vmem [shape: bf16[256,128], index: 7, kind: input, shape index: {}]
  %s8 = inlined_call_operand.vmem [shape: f32[1,128], index: 8, kind: input, shape index: {}]
  %s9 = inlined_call_operand.vmem [shape: f32[1,128], index: 9, kind: input, shape index: {}]
  %s10 = inlined_call_operand.vmem [shape: bf16[1024,32], index: 10, kind: input, shape index: {}]
  %s11 = inlined_call_operand.vmem [shape: f32[1,32], index: 11, kind: input, shape index: {}]
  %s12 = inlined_call_operand.vmem [shape: f32[8,32], index: 12, kind: output, shape index: {}]
  %s13 = sld [smem:[#allocation0]]
  $region58: #{encoder_forward.1} parent=0
    _
  %s15 = ssub.s32 1, %s13
  %s16 = scalar_select 0, %s15, %s13
  // Predicated region
  $region2: #{encoder_forward.1} parent=0 // pred_check
    _
  $region3: #{encoder_forward.1} parent=0 // pred_check_branch
    %18 = sbr.rel (0) target = $region5
  $region4: #{encoder_forward.1} parent=0 // pred_region
    _
  $region5: #{encoder_forward.1} parent=0 // pred_fallthru
    _
  // Predicated region
  $region6: #{encoder_forward.1} parent=0 // pred_check
    _
  $region7: #{encoder_forward.1} parent=0 // pred_check_branch
    %20 = sbr.rel (0) target = $region9
  $region8: #{encoder_forward.1} parent=0 // pred_region
    _
  $region9: #{encoder_forward.1} parent=0 // pred_fallthru
    _
  // Predicated region
  $region10: #{encoder_forward.1} parent=0 // pred_check
    _
  $region11: #{encoder_forward.1} parent=0 // pred_check_branch
    %22 = sbr.rel (0) target = $region13
  $region12: #{encoder_forward.1} parent=0 // pred_region
    _
  $region13: #{encoder_forward.1} parent=0 // pred_fallthru
    _
  // Predicated region
  $region14: #{encoder_forward.1} parent=0 // pred_check
    _
  $region15: #{encoder_forward.1} parent=0 // pred_check_branch
    %24 = sbr.rel (0) target = $region17
  $region16: #{encoder_forward.1} parent=0 // pred_region
    _
  $region17: #{encoder_forward.1} parent=0 // pred_fallthru
    _
  // Predicated region
  $region18: #{encoder_forward.1} parent=0 // pred_check
    _
  $region19: #{encoder_forward.1} parent=0 // pred_check_branch
    %26 = sbr.rel (0) target = $region21
  $region20: #{encoder_forward.1} parent=0 // pred_region
    _
  $region21: #{encoder_forward.1} parent=0 // pred_fallthru
    _
  // Predicated region
  $region22: #{encoder_forward.1} parent=0 // pred_check
    _
  $region23: #{encoder_forward.1} parent=0 // pred_check_branch
    %28 = sbr.rel (0) target = $region25
  $region24: #{encoder_forward.1} parent=0 // pred_region
    _
  $region25: #{encoder_forward.1} parent=0 // pred_fallthru
    _
  // Predicated region
  $region26: #{encoder_forward.1} parent=0 // pred_check
    _
  $region27: #{encoder_forward.1} parent=0 // pred_check_branch
    %30 = sbr.rel (0) target = $region29
  $region28: #{encoder_forward.1} parent=0 // pred_region
    _
  $region29: #{encoder_forward.1} parent=0 // pred_fallthru
    _
  // Predicated region
  $region30: #{encoder_forward.1} parent=0 // pred_check
    _
  $region31: #{encoder_forward.1} parent=0 // pred_check_branch
    %32 = sbr.rel (0) target = $region33
  $region32: #{encoder_forward.1} parent=0 // pred_region
    _
  $region33: #{encoder_forward.1} parent=0 // pred_fallthru
    _
  // Predicated region
  $region34: #{encoder_forward.1} parent=0 // pred_check
    _
  $region35: #{encoder_forward.1} parent=0 // pred_check_branch
    %34 = sbr.rel (0) target = $region37
  $region36: #{encoder_forward.1} parent=0 // pred_region
    _
  $region37: #{encoder_forward.1} parent=0 // pred_fallthru
    _
  // Predicated region
  $region38: #{encoder_forward.1} parent=0 // pred_check
    _
  $region39: #{encoder_forward.1} parent=0 // pred_check_branch
    %36 = sbr.rel (0) target = $region41
  $region40: #{encoder_forward.1} parent=0 // pred_region
    _
  $region41: #{encoder_forward.1} parent=0 // pred_fallthru
    _
  // Predicated region
  $region42: #{encoder_forward.1} parent=0 // pred_check
    _
  $region43: #{encoder_forward.1} parent=0 // pred_check_branch
    %38 = sbr.rel (0) target = $region45
  $region44: #{encoder_forward.1} parent=0 // pred_region
    _
  $region45: #{encoder_forward.1} parent=0 // pred_fallthru
    _
  // Predicated region
  $region46: #{encoder_forward.1} parent=0 // pred_check
    _
  $region47: #{encoder_forward.1} parent=0 // pred_check_branch
    %40 = sbr.rel (0) target = $region49
  $region48: #{encoder_forward.1} parent=0 // pred_region
    _
  $region49: #{encoder_forward.1} parent=0 // pred_fallthru
    _
  %v42 = vld [vmem:[%s0] sm:$0xff]
  %v43 = vld [vmem:[%s0 + $0x8] sm:$0xff]
  %v44 = vld [vmem:[%s0 + $0x10] sm:$0xff]
  %v45 = vld [vmem:[%s0 + $0x18] sm:$0xff]
  %v46 = vld [vmem:[%s0 + $0x20] sm:$0xff]
  %v47 = vld [vmem:[%s0 + $0x28] sm:$0xff]
  %v48 = vld [vmem:[%s0 + $0x30] sm:$0xff]
  %v49 = vld [vmem:[%s0 + $0x38] sm:$0xff]
  %v50 = vld [vmem:[%s0 + $0x40] sm:$0xff]
  %v51 = vld [vmem:[%s0 + $0x48] sm:$0xff]
  %v52 = vld [vmem:[%s0 + $0x50] sm:$0xff]
  %v53 = vld [vmem:[%s0 + $0x58] sm:$0xff]
  %v54 = vld [vmem:[%s0 + $0x60] sm:$0xff]
  %v55 = vld [vmem:[%s0 + $0x68] sm:$0xff]
  %v56 = vld [vmem:[%s0 + $0x70] sm:$0xff]
  %v57 = vld [vmem:[%s0 + $0x78] sm:$0xff]
  %v58 = vld [vmem:[%s0 + $0x80] sm:$0xff]
  %v59 = vld [vmem:[%s0 + $0x88] sm:$0xff]
  %v60 = vld [vmem:[%s0 + $0x90] sm:$0xff]
  %v61 = vld [vmem:[%s0 + $0x98] sm:$0xff]
  %v62 = vld [vmem:[%s0 + $0xa0] sm:$0xff]
  %v63 = vld [vmem:[%s0 + $0xa8] sm:$0xff]
  %v64 = vld [vmem:[%s0 + $0xb0] sm:$0xff]
  %v65 = vld [vmem:[%s0 + $0xb8] sm:$0xff]
  %v66 = vld [vmem:[%s0 + $0xc0] sm:$0xff]
  %v67 = vld [vmem:[%s0 + $0xc8] sm:$0xff]
  %v68 = vld [vmem:[%s0 + $0xd0] sm:$0xff]
  %v69 = vld [vmem:[%s0 + $0xd8] sm:$0xff]
  %v70 = vld [vmem:[%s0 + $0xe0] sm:$0xff]
  %v71 = vld [vmem:[%s0 + $0xe8] sm:$0xff]
  %v72 = vld [vmem:[%s0 + $0xf0] sm:$0xff]
  %v73 = vld [vmem:[%s0 + $0xf8] sm:$0xff]
  %v74 = vld [vmem:[%s1] sm:$0xff]
  %vm75 = vcmask 64512
  %v77 = vsel %vm75, %v42, 0
  %v80 = vsel %vm75, %v43, 0
  %v83 = vsel %vm75, %v44, 0
  %v86 = vsel %vm75, %v45, 0
  %v89 = vsel %vm75, %v46, 0
  %v92 = vsel %vm75, %v47, 0
  %v95 = vsel %vm75, %v48, 0
  %v98 = vsel %vm75, %v49, 0
  %v101 = vsel %vm75, %v50, 0
  %v104 = vsel %vm75, %v51, 0
  %v107 = vsel %vm75, %v52, 0
  %v110 = vsel %vm75, %v53, 0
  %v113 = vsel %vm75, %v54, 0
  %v116 = vsel %vm75, %v55, 0
  %v119 = vsel %vm75, %v56, 0
  %v122 = vsel %vm75, %v57, 0
  %v125 = vsel %vm75, %v58, 0
  %v128 = vsel %vm75, %v59, 0
  %v131 = vsel %vm75, %v60, 0
  %v134 = vsel %vm75, %v61, 0
  %v137 = vsel %vm75, %v62, 0
  %v140 = vsel %vm75, %v63, 0
  %v143 = vsel %vm75, %v64, 0
  %v146 = vsel %vm75, %v65, 0
  %v149 = vsel %vm75, %v66, 0
  %v152 = vsel %vm75, %v67, 0
  %v155 = vsel %vm75, %v68, 0
  %v158 = vsel %vm75, %v69, 0
  %v161 = vsel %vm75, %v70, 0
  %v164 = vsel %vm75, %v71, 0
  %v167 = vsel %vm75, %v72, 0
  %v170 = vsel %vm75, %v73, 0
  %172 = vmatprep.subr.mxu0 0.0
  %173 = vmatpush1.msra.mxu0 %v74
  %174 = vmatprep.subr.mxu0 0.0
  %175 = vmatpush1.msra.mxu0 0.0
  %176 = vmatprep.subr.mxu0 0.0
  %177 = vmatpush1.msra.mxu0 0.0
  %178 = vmatprep.subr.mxu0 0.0
  %179 = vmatpush1.msra.mxu0 0.0
  %180 = vmatprep.subr.mxu0 0.0
  %181 = vmatpush1.msra.mxu0 0.0
  %182 = vmatprep.subr.mxu0 0.0
  %183 = vmatpush1.msra.mxu0 0.0
  %184 = vmatprep.subr.mxu0 0.0
  %185 = vmatpush1.msra.mxu0 0.0
  %186 = vmatprep.subr.mxu0 0.0
  %187 = vmatpush1.msra.mxu0 0.0
  %188 = vmatprep.subr.mxu0 0.0
  %189 = vmatpush1.msra.mxu0 0.0
  %190 = vmatprep.subr.mxu0 0.0
  %191 = vmatpush1.msra.mxu0 0.0
  %192 = vmatprep.subr.mxu0 0.0
  %193 = vmatpush1.msra.mxu0 0.0
  %194 = vmatprep.subr.mxu0 0.0
  %195 = vmatpush1.msra.mxu0 0.0
  %196 = vmatprep.subr.mxu0 0.0
  %197 = vmatpush1.msra.mxu0 0.0
  %198 = vmatprep.subr.mxu0 0.0
  %199 = vmatpush1.msra.mxu0 0.0
  %200 = vmatprep.subr.mxu0 0.0
  %201 = vmatpush1.msra.mxu0 0.0
  %202 = vmatprep.subr.mxu0 0.0
  %203 = vmatpush1.msra.mxu0 0.0
  %204 = vmatprep.subr.mxu0 0.0
  %205 = vmatpush1.msra.mxu0 0.0
  %206 = vmatprep.subr.mxu0 0.0
  %207 = vmatpush1.msra.mxu0 0.0
  %208 = vmatprep.subr.mxu0 0.0
  %209 = vmatpush1.msra.mxu0 0.0
  %210 = vmatprep.subr.mxu0 0.0
  %211 = vmatpush1.msra.mxu0 0.0
  %212 = vmatprep.subr.mxu0 0.0
  %213 = vmatpush1.msra.mxu0 0.0
  %214 = vmatprep.subr.mxu0 0.0
  %215 = vmatpush1.msra.mxu0 0.0
  %216 = vmatprep.subr.mxu0 0.0
  %217 = vmatpush1.msra.mxu0 0.0
  %218 = vmatprep.subr.mxu0 0.0
  %219 = vmatpush1.msra.mxu0 0.0
  %220 = vmatprep.subr.mxu0 0.0
  %221 = vmatpush1.msra.mxu0 0.0
  %222 = vmatprep.subr.mxu0 0.0
  %223 = vmatpush1.msra.mxu0 0.0
  %224 = vmatprep.subr.mxu0 0.0
  %225 = vmatpush1.msra.mxu0 0.0
  %226 = vmatprep.subr.mxu0 0.0
  %227 = vmatpush1.msra.mxu0 0.0
  %228 = vmatprep.subr.mxu0 0.0
  %229 = vmatpush1.msra.mxu0 0.0
  %230 = vmatprep.subr.mxu0 0.0
  %231 = vmatpush1.msra.mxu0 0.0
  %232 = vmatprep.subr.mxu0 0.0
  %233 = vmatpush1.msra.mxu0 0.0
  %234 = vmatprep.subr.mxu0 0.0
  %235 = vmatpush1.msra.mxu0 0.0
  %236 = vmatprep.mubr.f32.mxu0 0.0
  %237 = vmatmul.mubr.f32.gmra.mrb[0].mxu0 %v77
  %v238 = vpop.f32.mrb[0].mxu0
  %v239 = vadd.f32 0.0, %v238
  %v240 = vpop.f32.mrb[0].mxu0
  %241 = vmatprep.mubr.f32.mxu0 0.0
  %242 = vmatmul.mubr.f32.gmra.mrb[0].mxu0 %v80
  %v243 = vpop.f32.mrb[0].mxu0
  %v244 = vadd.f32 0.0, %v243
  %v245 = vpop.f32.mrb[0].mxu0
  %246 = vmatprep.mubr.f32.mxu0 0.0
  %247 = vmatmul.mubr.f32.gmra.mrb[0].mxu0 %v83
  %v248 = vpop.f32.mrb[0].mxu0
  %v249 = vadd.f32 0.0, %v248
  %v250 = vpop.f32.mrb[0].mxu0
  %251 = vmatprep.mubr.f32.mxu0 0.0
  %252 = vmatmul.mubr.f32.gmra.mrb[0].mxu0 %v86
  %v253 = vpop.f32.mrb[0].mxu0
  %v254 = vadd.f32 0.0, %v253
  %v255 = vpop.f32.mrb[0].mxu0
  %256 = vmatprep.mubr.f32.mxu0 0.0
  %257 = vmatmul.mubr.f32.gmra.mrb[0].mxu0 %v89
  %v258 = vpop.f32.mrb[0].mxu0
  %v259 = vadd.f32 0.0, %v258
  %v260 = vpop.f32.mrb[0].mxu0
  %261 = vmatprep.mubr.f32.mxu0 0.0
  %262 = vmatmul.mubr.f32.gmra.mrb[0].mxu0 %v92
  %v263 = vpop.f32.mrb[0].mxu0
  %v264 = vadd.f32 0.0, %v263
  %v265 = vpop.f32.mrb[0].mxu0
  %266 = vmatprep.mubr.f32.mxu0 0.0
  %267 = vmatmul.mubr.f32.gmra.mrb[0].mxu0 %v95
  %v268 = vpop.f32.mrb[0].mxu0
  %v269 = vadd.f32 0.0, %v268
  %v270 = vpop.f32.mrb[0].mxu0
  %271 = vmatprep.mubr.f32.mxu0 0.0
  %272 = vmatmul.mubr.f32.gmra.mrb[0].mxu0 %v98
  %v273 = vpop.f32.mrb[0].mxu0
  %v274 = vadd.f32 0.0, %v273
  %v275 = vpop.f32.mrb[0].mxu0
  %276 = vmatprep.mubr.f32.mxu0 0.0
  %277 = vmatmul.mubr.f32.gmra.mrb[0].mxu0 %v101
  %v278 = vpop.f32.mrb[0].mxu0
  %v279 = vadd.f32 0.0, %v278
  %v280 = vpop.f32.mrb[0].mxu0
  %281 = vmatprep.mubr.f32.mxu0 0.0
  %282 = vmatmul.mubr.f32.gmra.mrb[0].mxu0 %v104
  %v283 = vpop.f32.mrb[0].mxu0
  %v284 = vadd.f32 0.0, %v283
  %v285 = vpop.f32.mrb[0].mxu0
  %286 = vmatprep.mubr.f32.mxu0 0.0
  %287 = vmatmul.mubr.f32.gmra.mrb[0].mxu0 %v107
  %v288 = vpop.f32.mrb[0].mxu0
  %v289 = vadd.f32 0.0, %v288
  %v290 = vpop.f32.mrb[0].mxu0
  %291 = vmatprep.mubr.f32.mxu0 0.0
  %292 = vmatmul.mubr.f32.gmra.mrb[0].mxu0 %v110
  %v293 = vpop.f32.mrb[0].mxu0
  %v294 = vadd.f32 0.0, %v293
  %v295 = vpop.f32.mrb[0].mxu0
  %296 = vmatprep.mubr.f32.mxu0 0.0
  %297 = vmatmul.mubr.f32.gmra.mrb[0].mxu0 %v113
  %v298 = vpop.f32.mrb[0].mxu0
  %v299 = vadd.f32 0.0, %v298
  %v300 = vpop.f32.mrb[0].mxu0
  %301 = vmatprep.mubr.f32.mxu0 0.0
  %302 = vmatmul.mubr.f32.gmra.mrb[0].mxu0 %v116
  %v303 = vpop.f32.mrb[0].mxu0
  %v304 = vadd.f32 0.0, %v303
  %v305 = vpop.f32.mrb[0].mxu0
  %306 = vmatprep.mubr.f32.mxu0 0.0
  %307 = vmatmul.mubr.f32.gmra.mrb[0].mxu0 %v119
  %v308 = vpop.f32.mrb[0].mxu0
  %v309 = vadd.f32 0.0, %v308
  %v310 = vpop.f32.mrb[0].mxu0
  %311 = vmatprep.mubr.f32.mxu0 0.0
  %312 = vmatmul.mubr.f32.gmra.mrb[0].mxu0 %v122
  %v313 = vpop.f32.mrb[0].mxu0
  %v314 = vadd.f32 0.0, %v313
  %v315 = vpop.f32.mrb[0].mxu0
  %316 = vmatprep.mubr.f32.mxu0 0.0
  %317 = vmatmul.mubr.f32.gmra.mrb[0].mxu0 %v125
  %v318 = vpop.f32.mrb[0].mxu0
  %v319 = vadd.f32 0.0, %v318
  %v320 = vpop.f32.mrb[0].mxu0
  %321 = vmatprep.mubr.f32.mxu0 0.0
  %322 = vmatmul.mubr.f32.gmra.mrb[0].mxu0 %v128
  %v323 = vpop.f32.mrb[0].mxu0
  %v324 = vadd.f32 0.0, %v323
  %v325 = vpop.f32.mrb[0].mxu0
  %326 = vmatprep.mubr.f32.mxu0 0.0
  %327 = vmatmul.mubr.f32.gmra.mrb[0].mxu0 %v131
  %v328 = vpop.f32.mrb[0].mxu0
  %v329 = vadd.f32 0.0, %v328
  %v330 = vpop.f32.mrb[0].mxu0
  %331 = vmatprep.mubr.f32.mxu0 0.0
  %332 = vmatmul.mubr.f32.gmra.mrb[0].mxu0 %v134
  %v333 = vpop.f32.mrb[0].mxu0
  %v334 = vadd.f32 0.0, %v333
  %v335 = vpop.f32.mrb[0].mxu0
  %336 = vmatprep.mubr.f32.mxu0 0.0
  %337 = vmatmul.mubr.f32.gmra.mrb[0].mxu0 %v137
  %v338 = vpop.f32.mrb[0].mxu0
  %v339 = vadd.f32 0.0, %v338
  %v340 = vpop.f32.mrb[0].mxu0
  %341 = vmatprep.mubr.f32.mxu0 0.0
  %342 = vmatmul.mubr.f32.gmra.mrb[0].mxu0 %v140
  %v343 = vpop.f32.mrb[0].mxu0
  %v344 = vadd.f32 0.0, %v343
  %v345 = vpop.f32.mrb[0].mxu0
  %346 = vmatprep.mubr.f32.mxu0 0.0
  %347 = vmatmul.mubr.f32.gmra.mrb[0].mxu0 %v143
  %v348 = vpop.f32.mrb[0].mxu0
  %v349 = vadd.f32 0.0, %v348
  %v350 = vpop.f32.mrb[0].mxu0
  %351 = vmatprep.mubr.f32.mxu0 0.0
  %352 = vmatmul.mubr.f32.gmra.mrb[0].mxu0 %v146
  %v353 = vpop.f32.mrb[0].mxu0
  %v354 = vadd.f32 0.0, %v353
  %v355 = vpop.f32.mrb[0].mxu0
  %356 = vmatprep.mubr.f32.mxu0 0.0
  %357 = vmatmul.mubr.f32.gmra.mrb[0].mxu0 %v149
  %v358 = vpop.f32.mrb[0].mxu0
  %v359 = vadd.f32 0.0, %v358
  %v360 = vpop.f32.mrb[0].mxu0
  %361 = vmatprep.mubr.f32.mxu0 0.0
  %362 = vmatmul.mubr.f32.gmra.mrb[0].mxu0 %v152
  %v363 = vpop.f32.mrb[0].mxu0
  %v364 = vadd.f32 0.0, %v363
  %v365 = vpop.f32.mrb[0].mxu0
  %366 = vmatprep.mubr.f32.mxu0 0.0
  %367 = vmatmul.mubr.f32.gmra.mrb[0].mxu0 %v155
  %v368 = vpop.f32.mrb[0].mxu0
  %v369 = vadd.f32 0.0, %v368
  %v370 = vpop.f32.mrb[0].mxu0
  %371 = vmatprep.mubr.f32.mxu0 0.0
  %372 = vmatmul.mubr.f32.gmra.mrb[0].mxu0 %v158
  %v373 = vpop.f32.mrb[0].mxu0
  %v374 = vadd.f32 0.0, %v373
  %v375 = vpop.f32.mrb[0].mxu0
  %376 = vmatprep.mubr.f32.mxu0 0.0
  %377 = vmatmul.mubr.f32.gmra.mrb[0].mxu0 %v161
  %v378 = vpop.f32.mrb[0].mxu0
  %v379 = vadd.f32 0.0, %v378
  %v380 = vpop.f32.mrb[0].mxu0
  %381 = vmatprep.mubr.f32.mxu0 0.0
  %382 = vmatmul.mubr.f32.gmra.mrb[0].mxu0 %v164
  %v383 = vpop.f32.mrb[0].mxu0
  %v384 = vadd.f32 0.0, %v383
  %v385 = vpop.f32.mrb[0].mxu0
  %386 = vmatprep.mubr.f32.mxu0 0.0
  %387 = vmatmul.mubr.f32.gmra.mrb[0].mxu0 %v167
  %v388 = vpop.f32.mrb[0].mxu0
  %v389 = vadd.f32 0.0, %v388
  %v390 = vpop.f32.mrb[0].mxu0
  %391 = vmatprep.mubr.f32.mxu0 0.0
  %392 = vmatmul.mubr.f32.gmra.mrb[0].mxu0 %v170
  %v393 = vpop.f32.mrb[0].mxu0
  %v394 = vadd.f32 0.0, %v393
  %v395 = vpop.f32.mrb[0].mxu0
  %396 = vdwg.mxu0
  %v397 = vld [vmem:[%s2] sm:$0x1]
  %v398 = vld [vmem:[%s3] sm:$0x1]
  %vm399 = vcmask 261120
  %v400 = vsel %vm399, %v239, 0.0
  %v401 = vsel %vm399, %v244, 0.0
  %v402 = vadd.f32 %v400, %v401
  %v403 = vsel %vm399, %v249, 0.0
  %v404 = vadd.f32 %v402, %v403
  %v405 = vsel %vm399, %v254, 0.0
  %v406 = vadd.f32 %v404, %v405
  %v407 = vsel %vm399, %v259, 0.0
  %v408 = vadd.f32 %v406, %v407
  %v409 = vsel %vm399, %v264, 0.0
  %v410 = vadd.f32 %v408, %v409
  %v411 = vsel %vm399, %v269, 0.0
  %v412 = vadd.f32 %v410, %v411
  %v413 = vsel %vm399, %v274, 0.0
  %v414 = vadd.f32 %v412, %v413
  %v415 = vsel %vm399, %v279, 0.0
  %v416 = vadd.f32 %v414, %v415
  %v417 = vsel %vm399, %v284, 0.0
  %v418 = vadd.f32 %v416, %v417
  %v419 = vsel %vm399, %v289, 0.0
  %v420 = vadd.f32 %v418, %v419
  %v421 = vsel %vm399, %v294, 0.0
  %v422 = vadd.f32 %v420, %v421
  %v423 = vsel %vm399, %v299, 0.0
  %v424 = vadd.f32 %v422, %v423
  %v425 = vsel %vm399, %v304, 0.0
  %v426 = vadd.f32 %v424, %v425
  %v427 = vsel %vm399, %v309, 0.0
  %v428 = vadd.f32 %v426, %v427
  %v429 = vsel %vm399, %v314, 0.0
  %v430 = vadd.f32 %v428, %v429
  %v431 = vsel %vm399, %v319, 0.0
  %v432 = vadd.f32 %v430, %v431
  %v433 = vsel %vm399, %v324, 0.0
  %v434 = vadd.f32 %v432, %v433
  %v435 = vsel %vm399, %v329, 0.0
  %v436 = vadd.f32 %v434, %v435
  %v437 = vsel %vm399, %v334, 0.0
  %v438 = vadd.f32 %v436, %v437
  %v439 = vsel %vm399, %v339, 0.0
  %v440 = vadd.f32 %v438, %v439
  %v441 = vsel %vm399, %v344, 0.0
  %v442 = vadd.f32 %v440, %v441
  %v443 = vsel %vm399, %v349, 0.0
  %v444 = vadd.f32 %v442, %v443
  %v445 = vsel %vm399, %v354, 0.0
  %v446 = vadd.f32 %v444, %v445
  %v447 = vsel %vm399, %v359, 0.0
  %v448 = vadd.f32 %v446, %v447
  %v449 = vsel %vm399, %v364, 0.0
  %v450 = vadd.f32 %v448, %v449
  %v451 = vsel %vm399, %v369, 0.0
  %v452 = vadd.f32 %v450, %v451
  %v453 = vsel %vm399, %v374, 0.0
  %v454 = vadd.f32 %v452, %v453
  %v455 = vsel %vm399, %v379, 0.0
  %v456 = vadd.f32 %v454, %v455
  %v457 = vsel %vm399, %v384, 0.0
  %v458 = vadd.f32 %v456, %v457
  %v459 = vsel %vm399, %v389, 0.0
  %v460 = vadd.f32 %v458, %v459
  %v461 = vsel %vm399, %v394, 0.0
  %v462 = vadd.f32 %v460, %v461
  %v463 = vrot.slane %v462, 4
  %v464 = vadd.f32 %v462, %v463
  %v465 = vrot.slane %v464, 2
  %v466 = vadd.f32 %v464, %v465
  %v467 = vrot.slane %v466, 1
  %v468 = vadd.f32 %v466, %v467
  %v469 = vmul.f32 %v468, 0.0078125
  %v470 = vmul.f32 %v239, %v239
  %v471 = vmul.f32 %v244, %v244
  %v472 = vmul.f32 %v249, %v249
  %v473 = vmul.f32 %v254, %v254
  %v474 = vmul.f32 %v259, %v259
  %v475 = vmul.f32 %v264, %v264
  %v476 = vmul.f32 %v269, %v269
  %v477 = vmul.f32 %v274, %v274
  %v478 = vmul.f32 %v279, %v279
  %v479 = vmul.f32 %v284, %v284
  %v480 = vmul.f32 %v289, %v289
  %v481 = vmul.f32 %v294, %v294
  %v482 = vmul.f32 %v299, %v299
  %v483 = vmul.f32 %v304, %v304
  %v484 = vmul.f32 %v309, %v309
  %v485 = vmul.f32 %v314, %v314
  %v486 = vmul.f32 %v319, %v319
  %v487 = vmul.f32 %v324, %v324
  %v488 = vmul.f32 %v329, %v329
  %v489 = vmul.f32 %v334, %v334
  %v490 = vmul.f32 %v339, %v339
  %v491 = vmul.f32 %v344, %v344
  %v492 = vmul.f32 %v349, %v349
  %v493 = vmul.f32 %v354, %v354
  %v494 = vmul.f32 %v359, %v359
  %v495 = vmul.f32 %v364, %v364
  %v496 = vmul.f32 %v369, %v369
  %v497 = vmul.f32 %v374, %v374
  %v498 = vmul.f32 %v379, %v379
  %v499 = vmul.f32 %v384, %v384
  %v500 = vmul.f32 %v389, %v389
  %v501 = vmul.f32 %v394, %v394
  %v502 = vsel %vm399, %v470, 0.0
  %v503 = vsel %vm399, %v471, 0.0
  %v504 = vadd.f32 %v502, %v503
  %v505 = vsel %vm399, %v472, 0.0
  %v506 = vadd.f32 %v504, %v505
  %v507 = vsel %vm399, %v473, 0.0
  %v508 = vadd.f32 %v506, %v507
  %v509 = vsel %vm399, %v474, 0.0
  %v510 = vadd.f32 %v508, %v509
  %v511 = vsel %vm399, %v475, 0.0
  %v512 = vadd.f32 %v510, %v511
  %v513 = vsel %vm399, %v476, 0.0
  %v514 = vadd.f32 %v512, %v513
  %v515 = vsel %vm399, %v477, 0.0
  %v516 = vadd.f32 %v514, %v515
  %v517 = vsel %vm399, %v478, 0.0
  %v518 = vadd.f32 %v516, %v517
  %v519 = vsel %vm399, %v479, 0.0
  %v520 = vadd.f32 %v518, %v519
  %v521 = vsel %vm399, %v480, 0.0
  %v522 = vadd.f32 %v520, %v521
  %v523 = vsel %vm399, %v481, 0.0
  %v524 = vadd.f32 %v522, %v523
  %v525 = vsel %vm399, %v482, 0.0
  %v526 = vadd.f32 %v524, %v525
  %v527 = vsel %vm399, %v483, 0.0
  %v528 = vadd.f32 %v526, %v527
  %v529 = vsel %vm399, %v484, 0.0
  %v530 = vadd.f32 %v528, %v529
  %v531 = vsel %vm399, %v485, 0.0
  %v532 = vadd.f32 %v530, %v531
  %v533 = vsel %vm399, %v486, 0.0
  %v534 = vadd.f32 %v532, %v533
  %v535 = vsel %vm399, %v487, 0.0
  %v536 = vadd.f32 %v534, %v535
  %v537 = vsel %vm399, %v488, 0.0
  %v538 = vadd.f32 %v536, %v537
  %v539 = vsel %vm399, %v489, 0.0
  %v540 = vadd.f32 %v538, %v539
  %v541 = vsel %vm399, %v490, 0.0
  %v542 = vadd.f32 %v540, %v541
  %v543 = vsel %vm399, %v491, 0.0
  %v544 = vadd.f32 %v542, %v543
  %v545 = vsel %vm399, %v492, 0.0
  %v546 = vadd.f32 %v544, %v545
  %v547 = vsel %vm399, %v493, 0.0
  %v548 = vadd.f32 %v546, %v547
  %v549 = vsel %vm399, %v494, 0.0
  %v550 = vadd.f32 %v548, %v549
  %v551 = vsel %vm399, %v495, 0.0
  %v552 = vadd.f32 %v550, %v551
  %v553 = vsel %vm399, %v496, 0.0
  %v554 = vadd.f32 %v552, %v553
  %v555 = vsel %vm399, %v497, 0.0
  %v556 = vadd.f32 %v554, %v555
  %v557 = vsel %vm399, %v498, 0.0
  %v558 = vadd.f32 %v556, %v557
  %v559 = vsel %vm399, %v499, 0.0
  %v560 = vadd.f32 %v558, %v559
  %v561 = vsel %vm399, %v500, 0.0
  %v562 = vadd.f32 %v560, %v561
  %v563 = vsel %vm399, %v501, 0.0
  %v564 = vadd.f32 %v562, %v563
  %v565 = vrot.slane %v564, 4
  %v566 = vadd.f32 %v564, %v565
  %v567 = vrot.slane %v566, 2
  %v568 = vadd.f32 %v566, %v567
  %v569 = vrot.slane %v568, 1
  %v570 = vadd.f32 %v568, %v569
  %v571 = vmul.f32 %v570, 0.0078125
  %v572 = vmul.f32 %v469, %v469
  %v573 = vsub.f32 %v571, %v572
  %v574 = vmax.f32 %v573, 0.0
  %v575 = vadd.f32 %v574, 1e-05
  %v576 = vrsqrt.pop %v575
  %v577 = vmul.f32 %v397, %v576
  %v578 = vmul.f32 %v577, %v469
  %v579 = vsub.f32 %v398, %v578
  %v581 = vlaneseq
  %v582 = vshrl.u32 %v581, 7
  %v583 = vsub.s32 0, %v582
  %v584 = vrot.slane %v577, %v583
  %v586 = vmul.f32 %v239, %v584
  %v587 = vmul.f32 %v244, %v584
  %v588 = vmul.f32 %v249, %v584
  %v589 = vmul.f32 %v254, %v584
  %v590 = vmul.f32 %v259, %v584
  %v591 = vmul.f32 %v264, %v584
  %v592 = vmul.f32 %v269, %v584
  %v593 = vmul.f32 %v274, %v584
  %v594 = vmul.f32 %v279, %v584
  %v595 = vmul.f32 %v284, %v584
  %v596 = vmul.f32 %v289, %v584
  %v597 = vmul.f32 %v294, %v584
  %v598 = vmul.f32 %v299, %v584
  %v599 = vmul.f32 %v304, %v584
  %v600 = vmul.f32 %v309, %v584
  %v601 = vmul.f32 %v314, %v584
  %v602 = vmul.f32 %v319, %v584
  %v603 = vmul.f32 %v324, %v584
  %v604 = vmul.f32 %v329, %v584
  %v605 = vmul.f32 %v334, %v584
  %v606 = vmul.f32 %v339, %v584
  %v607 = vmul.f32 %v344, %v584
  %v608 = vmul.f32 %v349, %v584
  %v609 = vmul.f32 %v354, %v584
  %v610 = vmul.f32 %v359, %v584
  %v611 = vmul.f32 %v364, %v584
  %v612 = vmul.f32 %v369, %v584
  %v613 = vmul.f32 %v374, %v584
  %v614 = vmul.f32 %v379, %v584
  %v615 = vmul.f32 %v384, %v584
  %v616 = vmul.f32 %v389, %v584
  %v617 = vmul.f32 %v394, %v584
  %v619 = vlaneseq
  %v620 = vshrl.u32 %v619, 7
  %v621 = vsub.s32 0, %v620
  %v622 = vrot.slane %v579, %v621
  %v624 = vadd.f32 %v586, %v622
  %v625 = vadd.f32 %v587, %v622
  %v626 = vadd.f32 %v588, %v622
  %v627 = vadd.f32 %v589, %v622
  %v628 = vadd.f32 %v590, %v622
  %v629 = vadd.f32 %v591, %v622
  %v630 = vadd.f32 %v592, %v622
  %v631 = vadd.f32 %v593, %v622
  %v632 = vadd.f32 %v594, %v622
  %v633 = vadd.f32 %v595, %v622
  %v634 = vadd.f32 %v596, %v622
  %v635 = vadd.f32 %v597, %v622
  %v636 = vadd.f32 %v598, %v622
  %v637 = vadd.f32 %v599, %v622
  %v638 = vadd.f32 %v600, %v622
  %v639 = vadd.f32 %v601, %v622
  %v640 = vadd.f32 %v602, %v622
  %v641 = vadd.f32 %v603, %v622
  %v642 = vadd.f32 %v604, %v622
  %v643 = vadd.f32 %v605, %v622
  %v644 = vadd.f32 %v606, %v622
  %v645 = vadd.f32 %v607, %v622
  %v646 = vadd.f32 %v608, %v622
  %v647 = vadd.f32 %v609, %v622
  %v648 = vadd.f32 %v610, %v622
  %v649 = vadd.f32 %v611, %v622
  %v650 = vadd.f32 %v612, %v622
  %v651 = vadd.f32 %v613, %v622
  %v652 = vadd.f32 %v614, %v622
  %v653 = vadd.f32 %v615, %v622
  %v654 = vadd.f32 %v616, %v622
  %v655 = vadd.f32 %v617, %v622
  %vm656 = vcmp.ge.f32.partialorder %v624, 0.0
  %vm657 = vcmp.ge.f32.partialorder %v625, 0.0
  %vm658 = vcmp.ge.f32.partialorder %v626, 0.0
  %vm659 = vcmp.ge.f32.partialorder %v627, 0.0
  %vm660 = vcmp.ge.f32.partialorder %v628, 0.0
  %vm661 = vcmp.ge.f32.partialorder %v629, 0.0
  %vm662 = vcmp.ge.f32.partialorder %v630, 0.0
  %vm663 = vcmp.ge.f32.partialorder %v631, 0.0
  %vm664 = vcmp.ge.f32.partialorder %v632, 0.0
  %vm665 = vcmp.ge.f32.partialorder %v633, 0.0
  %vm666 = vcmp.ge.f32.partialorder %v634, 0.0
  %vm667 = vcmp.ge.f32.partialorder %v635, 0.0
  %vm668 = vcmp.ge.f32.partialorder %v636, 0.0
  %vm669 = vcmp.ge.f32.partialorder %v637, 0.0
  %vm670 = vcmp.ge.f32.partialorder %v638, 0.0
  %vm671 = vcmp.ge.f32.partialorder %v639, 0.0
  %vm672 = vcmp.ge.f32.partialorder %v640, 0.0
  %vm673 = vcmp.ge.f32.partialorder %v641, 0.0
  %vm674 = vcmp.ge.f32.partialorder %v642, 0.0
  %vm675 = vcmp.ge.f32.partialorder %v643, 0.0
  %vm676 = vcmp.ge.f32.partialorder %v644, 0.0
  %vm677 = vcmp.ge.f32.partialorder %v645, 0.0
  %vm678 = vcmp.ge.f32.partialorder %v646, 0.0
  %vm679 = vcmp.ge.f32.partialorder %v647, 0.0
  %vm680 = vcmp.ge.f32.partialorder %v648, 0.0
  %vm681 = vcmp.ge.f32.partialorder %v649, 0.0
  %vm682 = vcmp.ge.f32.partialorder %v650, 0.0
  %vm683 = vcmp.ge.f32.partialorder %v651, 0.0
  %vm684 = vcmp.ge.f32.partialorder %v652, 0.0
  %vm685 = vcmp.ge.f32.partialorder %v653, 0.0
  %vm686 = vcmp.ge.f32.partialorder %v654, 0.0
  %vm687 = vcmp.ge.f32.partialorder %v655, 0.0
  %v688 = vmul.f32 %v624, 0.2
  %v689 = vmul.f32 %v625, 0.2
  %v690 = vmul.f32 %v626, 0.2
  %v691 = vmul.f32 %v627, 0.2
  %v692 = vmul.f32 %v628, 0.2
  %v693 = vmul.f32 %v629, 0.2
  %v694 = vmul.f32 %v630, 0.2
  %v695 = vmul.f32 %v631, 0.2
  %v696 = vmul.f32 %v632, 0.2
  %v697 = vmul.f32 %v633, 0.2
  %v698 = vmul.f32 %v634, 0.2
  %v699 = vmul.f32 %v635, 0.2
  %v700 = vmul.f32 %v636, 0.2
  %v701 = vmul.f32 %v637, 0.2
  %v702 = vmul.f32 %v638, 0.2
  %v703 = vmul.f32 %v639, 0.2
  %v704 = vmul.f32 %v640, 0.2
  %v705 = vmul.f32 %v641, 0.2
  %v706 = vmul.f32 %v642, 0.2
  %v707 = vmul.f32 %v643, 0.2
  %v708 = vmul.f32 %v644, 0.2
  %v709 = vmul.f32 %v645, 0.2
  %v710 = vmul.f32 %v646, 0.2
  %v711 = vmul.f32 %v647, 0.2
  %v712 = vmul.f32 %v648, 0.2
  %v713 = vmul.f32 %v649, 0.2
  %v714 = vmul.f32 %v650, 0.2
  %v715 = vmul.f32 %v651, 0.2
  %v716 = vmul.f32 %v652, 0.2
  %v717 = vmul.f32 %v653, 0.2
  %v718 = vmul.f32 %v654, 0.2
  %v719 = vmul.f32 %v655, 0.2
  %v720 = vsel %vm656, %v624, %v688
  %v721 = vsel %vm657, %v625, %v689
  %v722 = vsel %vm658, %v626, %v690
  %v723 = vsel %vm659, %v627, %v691
  %v724 = vsel %vm660, %v628, %v692
  %v725 = vsel %vm661, %v629, %v693
  %v726 = vsel %vm662, %v630, %v694
  %v727 = vsel %vm663, %v631, %v695
  %v728 = vsel %vm664, %v632, %v696
  %v729 = vsel %vm665, %v633, %v697
  %v730 = vsel %vm666, %v634, %v698
  %v731 = vsel %vm667, %v635, %v699
  %v732 = vsel %vm668, %v636, %v700
  %v733 = vsel %vm669, %v637, %v701
  %v734 = vsel %vm670, %v638, %v702
  %v735 = vsel %vm671, %v639, %v703
  %v736 = vsel %vm672, %v640, %v704
  %v737 = vsel %vm673, %v641, %v705
  %v738 = vsel %vm674, %v642, %v706
  %v739 = vsel %vm675, %v643, %v707
  %v740 = vsel %vm676, %v644, %v708
  %v741 = vsel %vm677, %v645, %v709
  %v742 = vsel %vm678, %v646, %v710
  %v743 = vsel %vm679, %v647, %v711
  %v744 = vsel %vm680, %v648, %v712
  %v745 = vsel %vm681, %v649, %v713
  %v746 = vsel %vm682, %v650, %v714
  %v747 = vsel %vm683, %v651, %v715
  %v748 = vsel %vm684, %v652, %v716
  %v749 = vsel %vm685, %v653, %v717
  %v750 = vsel %vm686, %v654, %v718
  %v751 = vsel %vm687, %v655, %v719
  %v752 = vlaneseq
  %v753 = vshrl.u32 %v752, 7
  %vm754 = vcmp.lt.s32.totalorder %v753, 4
  %v755 = vsel %vm754, %v720, 0.0
  %v756 = vsel %vm754, %v722, 0.0
  %v757 = vsel %vm754, %v724, 0.0
  %v758 = vsel %vm754, %v726, 0.0
  %v759 = vsel %vm754, %v728, 0.0
  %v760 = vsel %vm754, %v730, 0.0
  %v761 = vsel %vm754, %v732, 0.0
  %v762 = vsel %vm754, %v734, 0.0
  %v763 = vsel %vm754, %v736, 0.0
  %v764 = vsel %vm754, %v738, 0.0
  %v765 = vsel %vm754, %v740, 0.0
  %v766 = vsel %vm754, %v742, 0.0
  %v767 = vsel %vm754, %v744, 0.0
  %v768 = vsel %vm754, %v746, 0.0
  %v769 = vsel %vm754, %v748, 0.0
  %v770 = vsel %vm754, %v750, 0.0
  %v771 = vsel %vm754, %v721, 0.0
  %v772 = vsel %vm754, %v723, 0.0
  %v773 = vsel %vm754, %v725, 0.0
  %v774 = vsel %vm754, %v727, 0.0
  %v775 = vsel %vm754, %v729, 0.0
  %v776 = vsel %vm754, %v731, 0.0
  %v777 = vsel %vm754, %v733, 0.0
  %v778 = vsel %vm754, %v735, 0.0
  %v779 = vsel %vm754, %v737, 0.0
  %v780 = vsel %vm754, %v739, 0.0
  %v781 = vsel %vm754, %v741, 0.0
  %v782 = vsel %vm754, %v743, 0.0
  %v783 = vsel %vm754, %v745, 0.0
  %v784 = vsel %vm754, %v747, 0.0
  %v785 = vsel %vm754, %v749, 0.0
  %v786 = vsel %vm754, %v751, 0.0
  %803 = vrot.lane.b32.xlu0 %v755, 32
  %v804 = vpop.permute.xlu0 %803
  %805 = vrot.lane.b32.xlu0 %v756, 32
  %v806 = vpop.permute.xlu0 %805
  %807 = vrot.lane.b32.xlu0 %v757, 32
  %v808 = vpop.permute.xlu0 %807
  %809 = vrot.lane.b32.xlu0 %v758, 32
  %v810 = vpop.permute.xlu0 %809
  %811 = vrot.lane.b32.xlu0 %v759, 32
  %v812 = vpop.permute.xlu0 %811
  %813 = vrot.lane.b32.xlu0 %v760, 32
  %v814 = vpop.permute.xlu0 %813
  %815 = vrot.lane.b32.xlu0 %v761, 32
  %v816 = vpop.permute.xlu0 %815
  %817 = vrot.lane.b32.xlu0 %v762, 32
  %v818 = vpop.permute.xlu0 %817
  %819 = vrot.lane.b32.xlu0 %v763, 32
  %v820 = vpop.permute.xlu0 %819
  %821 = vrot.lane.b32.xlu0 %v764, 32
  %v822 = vpop.permute.xlu0 %821
  %823 = vrot.lane.b32.xlu0 %v765, 32
  %v824 = vpop.permute.xlu0 %823
  %825 = vrot.lane.b32.xlu0 %v766, 32
  %v826 = vpop.permute.xlu0 %825
  %827 = vrot.lane.b32.xlu0 %v767, 32
  %v828 = vpop.permute.xlu0 %827
  %829 = vrot.lane.b32.xlu0 %v768, 32
  %v830 = vpop.permute.xlu0 %829
  %831 = vrot.lane.b32.xlu0 %v769, 32
  %v832 = vpop.permute.xlu0 %831
  %833 = vrot.lane.b32.xlu0 %v770, 32
  %v834 = vpop.permute.xlu0 %833
  %867 = vrot.lane.b32.xlu0 %v771, 64
  %v868 = vpop.permute.xlu0 %867
  %869 = vrot.lane.b32.xlu0 %v772, 64
  %v870 = vpop.permute.xlu0 %869
  %871 = vrot.lane.b32.xlu0 %v773, 64
  %v872 = vpop.permute.xlu0 %871
  %873 = vrot.lane.b32.xlu0 %v774, 64
  %v874 = vpop.permute.xlu0 %873
  %875 = vrot.lane.b32.xlu0 %v775, 64
  %v876 = vpop.permute.xlu0 %875
  %877 = vrot.lane.b32.xlu0 %v776, 64
  %v878 = vpop.permute.xlu0 %877
  %879 = vrot.lane.b32.xlu0 %v777, 64
  %v880 = vpop.permute.xlu0 %879
  %881 = vrot.lane.b32.xlu0 %v778, 64
  %v882 = vpop.permute.xlu0 %881
  %883 = vrot.lane.b32.xlu0 %v779, 64
  %v884 = vpop.permute.xlu0 %883
  %885 = vrot.lane.b32.xlu0 %v780, 64
  %v886 = vpop.permute.xlu0 %885
  %887 = vrot.lane.b32.xlu0 %v781, 64
  %v888 = vpop.permute.xlu0 %887
  %889 = vrot.lane.b32.xlu0 %v782, 64
  %v890 = vpop.permute.xlu0 %889
  %891 = vrot.lane.b32.xlu0 %v783, 64
  %v892 = vpop.permute.xlu0 %891
  %893 = vrot.lane.b32.xlu0 %v784, 64
  %v894 = vpop.permute.xlu0 %893
  %895 = vrot.lane.b32.xlu0 %v785, 64
  %v896 = vpop.permute.xlu0 %895
  %897 = vrot.lane.b32.xlu0 %v786, 64
  %v898 = vpop.permute.xlu0 %897
  %916 = vrot.lane.b32.xlu0 %v756, 96
  %v917 = vpop.permute.xlu0 %916
  %918 = vrot.lane.b32.xlu0 %v757, 96
  %v919 = vpop.permute.xlu0 %918
  %920 = vrot.lane.b32.xlu0 %v758, 96
  %v921 = vpop.permute.xlu0 %920
  %922 = vrot.lane.b32.xlu0 %v759, 96
  %v923 = vpop.permute.xlu0 %922
  %924 = vrot.lane.b32.xlu0 %v760, 96
  %v925 = vpop.permute.xlu0 %924
  %926 = vrot.lane.b32.xlu0 %v761, 96
  %v927 = vpop.permute.xlu0 %926
  %928 = vrot.lane.b32.xlu0 %v762, 96
  %v929 = vpop.permute.xlu0 %928
  %930 = vrot.lane.b32.xlu0 %v763, 96
  %v931 = vpop.permute.xlu0 %930
  %932 = vrot.lane.b32.xlu0 %v764, 96
  %v933 = vpop.permute.xlu0 %932
  %934 = vrot.lane.b32.xlu0 %v765, 96
  %v935 = vpop.permute.xlu0 %934
  %936 = vrot.lane.b32.xlu0 %v766, 96
  %v937 = vpop.permute.xlu0 %936
  %938 = vrot.lane.b32.xlu0 %v767, 96
  %v939 = vpop.permute.xlu0 %938
  %940 = vrot.lane.b32.xlu0 %v768, 96
  %v941 = vpop.permute.xlu0 %940
  %942 = vrot.lane.b32.xlu0 %v769, 96
  %v943 = vpop.permute.xlu0 %942
  %944 = vrot.lane.b32.xlu0 %v770, 96
  %v945 = vpop.permute.xlu0 %944
  %946 = vrot.lane.b32.xlu0 0.0, 96
  %v947 = vpop.permute.xlu0 %946
  %v964 = vsel %vm399, 0.0, %v804
  %v965 = vsel %vm399, %v771, %v806
  %v966 = vsel %vm399, %v772, %v808
  %v967 = vsel %vm399, %v773, %v810
  %v968 = vsel %vm399, %v774, %v812
  %v969 = vsel %vm399, %v775, %v814
  %v970 = vsel %vm399, %v776, %v816
  %v971 = vsel %vm399, %v777, %v818
  %v972 = vsel %vm399, %v778, %v820
  %v973 = vsel %vm399, %v779, %v822
  %v974 = vsel %vm399, %v780, %v824
  %v975 = vsel %vm399, %v781, %v826
  %v976 = vsel %vm399, %v782, %v828
  %v977 = vsel %vm399, %v783, %v830
  %v978 = vsel %vm399, %v784, %v832
  %v979 = vsel %vm399, %v785, %v834
  %vm980 = vcmask 523264
  %v981 = vsel %vm980, %v964, %v868
  %v982 = vsel %vm980, %v965, %v870
  %v983 = vsel %vm980, %v966, %v872
  %v984 = vsel %vm980, %v967, %v874
  %v985 = vsel %vm980, %v968, %v876
  %v986 = vsel %vm980, %v969, %v878
  %v987 = vsel %vm980, %v970, %v880
  %v988 = vsel %vm980, %v971, %v882
  %v989 = vsel %vm980, %v972, %v884
  %v990 = vsel %vm980, %v973, %v886
  %v991 = vsel %vm980, %v974, %v888
  %v992 = vsel %vm980, %v975, %v890
  %v993 = vsel %vm980, %v976, %v892
  %v994 = vsel %vm980, %v977, %v894
  %v995 = vsel %vm980, %v978, %v896
  %v996 = vsel %vm980, %v979, %v898
  %vm997 = vcmask 785408
  %v998 = vsel %vm997, %v981, %v917
  %v999 = vsel %vm997, %v982, %v919
  %v1000 = vsel %vm997, %v983, %v921
  %v1001 = vsel %vm997, %v984, %v923
  %v1002 = vsel %vm997, %v985, %v925
  %v1003 = vsel %vm997, %v986, %v927
  %v1004 = vsel %vm997, %v987, %v929
  %v1005 = vsel %vm997, %v988, %v931
  %v1006 = vsel %vm997, %v989, %v933
  %v1007 = vsel %vm997, %v990, %v935
  %v1008 = vsel %vm997, %v991, %v937
  %v1009 = vsel %vm997, %v992, %v939
  %v1010 = vsel %vm997, %v993, %v941
  %v1011 = vsel %vm997, %v994, %v943
  %v1012 = vsel %vm997, %v995, %v945
  %v1013 = vsel %vm997, %v996, %v947
  %v1014 = vpack.c.bf16 %v999, %v998
  %v1015 = vpack.c.bf16 %v1001, %v1000
  %v1016 = vpack.c.bf16 %v1003, %v1002
  %v1017 = vpack.c.bf16 %v1005, %v1004
  %v1018 = vpack.c.bf16 %v1007, %v1006
  %v1019 = vpack.c.bf16 %v1009, %v1008
  %v1020 = vpack.c.bf16 %v1011, %v1010
  %v1021 = vpack.c.bf16 %v1013, %v1012
  %v1022 = vld [vmem:[%s4] sm:$0xf]
  %v1023 = vld [vmem:[%s4 + $0x4] sm:$0xf]
  %v1024 = vld [vmem:[%s4 + $0x8] sm:$0xf]
  %v1025 = vld [vmem:[%s4 + $0xc] sm:$0xf]
  %v1026 = vld [vmem:[%s4 + $0x10] sm:$0xf]
  %v1027 = vld [vmem:[%s4 + $0x14] sm:$0xf]
  %v1028 = vld [vmem:[%s4 + $0x18] sm:$0xf]
  %v1029 = vld [vmem:[%s4 + $0x1c] sm:$0xf]
  %v1030 = vld [vmem:[%s4 + $0x20] sm:$0xf]
  %v1031 = vld [vmem:[%s4 + $0x24] sm:$0xf]
  %v1032 = vld [vmem:[%s4 + $0x28] sm:$0xf]
  %v1033 = vld [vmem:[%s4 + $0x2c] sm:$0xf]
  %v1034 = vld [vmem:[%s4 + $0x30] sm:$0xf]
  %v1035 = vld [vmem:[%s4 + $0x34] sm:$0xf]
  %v1036 = vld [vmem:[%s4 + $0x38] sm:$0xf]
  %v1037 = vld [vmem:[%s4 + $0x3c] sm:$0xf]
  %v1054 = vunpack.c.l.b16 %v1022
  %v1055 = vunpack.c.l.b16 %v1023
  %v1056 = vunpack.c.l.b16 %v1024
  %v1057 = vunpack.c.l.b16 %v1025
  %v1058 = vunpack.c.l.b16 %v1026
  %v1059 = vunpack.c.l.b16 %v1027
  %v1060 = vunpack.c.l.b16 %v1028
  %v1061 = vunpack.c.l.b16 %v1029
  %v1062 = vunpack.c.l.b16 %v1030
  %v1063 = vunpack.c.l.b16 %v1031
  %v1064 = vunpack.c.l.b16 %v1032
  %v1065 = vunpack.c.l.b16 %v1033
  %v1066 = vunpack.c.l.b16 %v1034
  %v1067 = vunpack.c.l.b16 %v1035
  %v1068 = vunpack.c.l.b16 %v1036
  %v1069 = vunpack.c.l.b16 %v1037
  %v1070 = vpack.c.b16 %v1055, %v1054
  %v1071 = vpack.c.b16 %v1057, %v1056
  %v1072 = vpack.c.b16 %v1059, %v1058
  %v1073 = vpack.c.b16 %v1061, %v1060
  %v1074 = vpack.c.b16 %v1063, %v1062
  %v1075 = vpack.c.b16 %v1065, %v1064
  %v1076 = vpack.c.b16 %v1067, %v1066
  %v1077 = vpack.c.b16 %v1069, %v1068
  %1086 = vmatprep.subr.bf16.mxu0 0
  %1087 = vmatpush1.bf16.msra.mxu0 %v1070
  %1088 = vmatprep.subr.bf16.mxu0 0
  %1089 = vmatpush1.bf16.msra.mxu0 %v1071
  %1090 = vmatprep.subr.bf16.mxu0 0
  %1091 = vmatpush1.bf16.msra.mxu0 %v1072
  %1092 = vmatprep.subr.bf16.mxu0 0
  %1093 = vmatpush1.bf16.msra.mxu0 %v1073
  %1094 = vmatprep.subr.bf16.mxu0 0
  %1095 = vmatpush1.bf16.msra.mxu0 %v1074
  %1096 = vmatprep.subr.bf16.mxu0 0
  %1097 = vmatpush1.bf16.msra.mxu0 %v1075
  %1098 = vmatprep.subr.bf16.mxu0 0
  %1099 = vmatpush1.bf16.msra.mxu0 %v1076
  %1100 = vmatprep.subr.bf16.mxu0 0
  %1101 = vmatpush1.bf16.msra.mxu0 %v1077
  %1102 = vmatprep.subr.bf16.mxu0 0
  %1103 = vmatpush1.bf16.msra.mxu0 0
  %1104 = vmatprep.subr.bf16.mxu0 0
  %1105 = vmatpush1.bf16.msra.mxu0 0
  %1106 = vmatprep.subr.bf16.mxu0 0
  %1107 = vmatpush1.bf16.msra.mxu0 0
  %1108 = vmatprep.subr.bf16.mxu0 0
  %1109 = vmatpush1.bf16.msra.mxu0 0
  %1110 = vmatprep.subr.bf16.mxu0 0
  %1111 = vmatpush1.bf16.msra.mxu0 0
  %1112 = vmatprep.subr.bf16.mxu0 0
  %1113 = vmatpush1.bf16.msra.mxu0 0
  %1114 = vmatprep.subr.bf16.mxu0 0
  %1115 = vmatpush1.bf16.msra.mxu0 0
  %1116 = vmatprep.subr.bf16.mxu0 0
  %1117 = vmatpush1.bf16.msra.mxu0 0
  %1118 = vmatprep.mubr.bf16.mxu0 0
  %1119 = vmatmul.mubr.bf16.gmra.mrb[0].mxu0 %v1014
  %v1120 = vpop.f32.mrb[0].mxu0
  %v1121 = vadd.f32 0.0, %v1120
  %v1122 = vpop.f32.mrb[0].mxu0
  %v1123 = vpop.f32.mrb[0].mxu0
  %v1124 = vadd.f32 0.0, %v1123
  %v1125 = vpop.f32.mrb[0].mxu0
  %1126 = vmatprep.mubr.bf16.mxu0 0
  %1127 = vmatmul.mubr.bf16.gmra.mrb[0].mxu0 %v1015
  %v1128 = vpop.f32.mrb[0].mxu0
  %v1129 = vadd.f32 0.0, %v1128
  %v1130 = vpop.f32.mrb[0].mxu0
  %v1131 = vpop.f32.mrb[0].mxu0
  %v1132 = vadd.f32 0.0, %v1131
  %v1133 = vpop.f32.mrb[0].mxu0
  %1134 = vmatprep.mubr.bf16.mxu0 0
  %1135 = vmatmul.mubr.bf16.gmra.mrb[0].mxu0 %v1016
  %v1136 = vpop.f32.mrb[0].mxu0
  %v1137 = vadd.f32 0.0, %v1136
  %v1138 = vpop.f32.mrb[0].mxu0
  %v1139 = vpop.f32.mrb[0].mxu0
  %v1140 = vadd.f32 0.0, %v1139
  %v1141 = vpop.f32.mrb[0].mxu0
  %1142 = vmatprep.mubr.bf16.mxu0 0
  %1143 = vmatmul.mubr.bf16.gmra.mrb[0].mxu0 %v1017
  %v1144 = vpop.f32.mrb[0].mxu0
  %v1145 = vadd.f32 0.0, %v1144
  %v1146 = vpop.f32.mrb[0].mxu0
  %v1147 = vpop.f32.mrb[0].mxu0
  %v1148 = vadd.f32 0.0, %v1147
  %v1149 = vpop.f32.mrb[0].mxu0
  %1150 = vmatprep.mubr.bf16.mxu0 0
  %1151 = vmatmul.mubr.bf16.gmra.mrb[0].mxu0 %v1018
  %v1152 = vpop.f32.mrb[0].mxu0
  %v1153 = vadd.f32 0.0, %v1152
  %v1154 = vpop.f32.mrb[0].mxu0
  %v1155 = vpop.f32.mrb[0].mxu0
  %v1156 = vadd.f32 0.0, %v1155
  %v1157 = vpop.f32.mrb[0].mxu0
  %1158 = vmatprep.mubr.bf16.mxu0 0
  %1159 = vmatmul.mubr.bf16.gmra.mrb[0].mxu0 %v1019
  %v1160 = vpop.f32.mrb[0].mxu0
  %v1161 = vadd.f32 0.0, %v1160
  %v1162 = vpop.f32.mrb[0].mxu0
  %v1163 = vpop.f32.mrb[0].mxu0
  %v1164 = vadd.f32 0.0, %v1163
  %v1165 = vpop.f32.mrb[0].mxu0
  %1166 = vmatprep.mubr.bf16.mxu0 0
  %1167 = vmatmul.mubr.bf16.gmra.mrb[0].mxu0 %v1020
  %v1168 = vpop.f32.mrb[0].mxu0
  %v1169 = vadd.f32 0.0, %v1168
  %v1170 = vpop.f32.mrb[0].mxu0
  %v1171 = vpop.f32.mrb[0].mxu0
  %v1172 = vadd.f32 0.0, %v1171
  %v1173 = vpop.f32.mrb[0].mxu0
  %1174 = vmatprep.mubr.bf16.mxu0 0
  %1175 = vmatmul.mubr.bf16.gmra.mrb[0].mxu0 %v1021
  %v1176 = vpop.f32.mrb[0].mxu0
  %v1177 = vadd.f32 0.0, %v1176
  %v1178 = vpop.f32.mrb[0].mxu0
  %v1179 = vpop.f32.mrb[0].mxu0
  %v1180 = vadd.f32 0.0, %v1179
  %v1181 = vpop.f32.mrb[0].mxu0
  %1182 = vdwg.mxu0
  %v1183 = vld [vmem:[%s5] sm:$0x1]
  %v1184 = vld [vmem:[%s6] sm:$0x1]
  %v1185 = vsel %vm980, %v1121, 0.0
  %v1186 = vsel %vm980, %v1124, 0.0
  %v1187 = vadd.f32 %v1185, %v1186
  %v1188 = vsel %vm980, %v1129, 0.0
  %v1189 = vadd.f32 %v1187, %v1188
  %v1190 = vsel %vm980, %v1132, 0.0
  %v1191 = vadd.f32 %v1189, %v1190
  %v1192 = vsel %vm980, %v1137, 0.0
  %v1193 = vadd.f32 %v1191, %v1192
  %v1194 = vsel %vm980, %v1140, 0.0
  %v1195 = vadd.f32 %v1193, %v1194
  %v1196 = vsel %vm980, %v1145, 0.0
  %v1197 = vadd.f32 %v1195, %v1196
  %v1198 = vsel %vm980, %v1148, 0.0
  %v1199 = vadd.f32 %v1197, %v1198
  %v1200 = vsel %vm980, %v1153, 0.0
  %v1201 = vadd.f32 %v1199, %v1200
  %v1202 = vsel %vm980, %v1156, 0.0
  %v1203 = vadd.f32 %v1201, %v1202
  %v1204 = vsel %vm980, %v1161, 0.0
  %v1205 = vadd.f32 %v1203, %v1204
  %v1206 = vsel %vm980, %v1164, 0.0
  %v1207 = vadd.f32 %v1205, %v1206
  %v1208 = vsel %vm980, %v1169, 0.0
  %v1209 = vadd.f32 %v1207, %v1208
  %v1210 = vsel %vm980, %v1172, 0.0
  %v1211 = vadd.f32 %v1209, %v1210
  %v1212 = vsel %vm980, %v1177, 0.0
  %v1213 = vadd.f32 %v1211, %v1212
  %v1214 = vsel %vm980, %v1180, 0.0
  %v1215 = vadd.f32 %v1213, %v1214
  %v1216 = vrot.slane %v1215, 4
  %v1217 = vadd.f32 %v1215, %v1216
  %v1218 = vrot.slane %v1217, 2
  %v1219 = vadd.f32 %v1217, %v1218
  %v1220 = vrot.slane %v1219, 1
  %v1221 = vadd.f32 %v1219, %v1220
  %v1222 = vmul.f32 %v1221, 0.015625
  %v1223 = vmul.f32 %v1121, %v1121
  %v1224 = vmul.f32 %v1124, %v1124
  %v1225 = vmul.f32 %v1129, %v1129
  %v1226 = vmul.f32 %v1132, %v1132
  %v1227 = vmul.f32 %v1137, %v1137
  %v1228 = vmul.f32 %v1140, %v1140
  %v1229 = vmul.f32 %v1145, %v1145
  %v1230 = vmul.f32 %v1148, %v1148
  %v1231 = vmul.f32 %v1153, %v1153
  %v1232 = vmul.f32 %v1156, %v1156
  %v1233 = vmul.f32 %v1161, %v1161
  %v1234 = vmul.f32 %v1164, %v1164
  %v1235 = vmul.f32 %v1169, %v1169
  %v1236 = vmul.f32 %v1172, %v1172
  %v1237 = vmul.f32 %v1177, %v1177
  %v1238 = vmul.f32 %v1180, %v1180
  %v1239 = vsel %vm980, %v1223, 0.0
  %v1240 = vsel %vm980, %v1224, 0.0
  %v1241 = vadd.f32 %v1239, %v1240
  %v1242 = vsel %vm980, %v1225, 0.0
  %v1243 = vadd.f32 %v1241, %v1242
  %v1244 = vsel %vm980, %v1226, 0.0
  %v1245 = vadd.f32 %v1243, %v1244
  %v1246 = vsel %vm980, %v1227, 0.0
  %v1247 = vadd.f32 %v1245, %v1246
  %v1248 = vsel %vm980, %v1228, 0.0
  %v1249 = vadd.f32 %v1247, %v1248
  %v1250 = vsel %vm980, %v1229, 0.0
  %v1251 = vadd.f32 %v1249, %v1250
  %v1252 = vsel %vm980, %v1230, 0.0
  %v1253 = vadd.f32 %v1251, %v1252
  %v1254 = vsel %vm980, %v1231, 0.0
  %v1255 = vadd.f32 %v1253, %v1254
  %v1256 = vsel %vm980, %v1232, 0.0
  %v1257 = vadd.f32 %v1255, %v1256
  %v1258 = vsel %vm980, %v1233, 0.0
  %v1259 = vadd.f32 %v1257, %v1258
  %v1260 = vsel %vm980, %v1234, 0.0
  %v1261 = vadd.f32 %v1259, %v1260
  %v1262 = vsel %vm980, %v1235, 0.0
  %v1263 = vadd.f32 %v1261, %v1262
  %v1264 = vsel %vm980, %v1236, 0.0
  %v1265 = vadd.f32 %v1263, %v1264
  %v1266 = vsel %vm980, %v1237, 0.0
  %v1267 = vadd.f32 %v1265, %v1266
  %v1268 = vsel %vm980, %v1238, 0.0
  %v1269 = vadd.f32 %v1267, %v1268
  %v1270 = vrot.slane %v1269, 4
  %v1271 = vadd.f32 %v1269, %v1270
  %v1272 = vrot.slane %v1271, 2
  %v1273 = vadd.f32 %v1271, %v1272
  %v1274 = vrot.slane %v1273, 1
  %v1275 = vadd.f32 %v1273, %v1274
  %v1276 = vmul.f32 %v1275, 0.015625
  %v1277 = vmul.f32 %v1222, %v1222
  %v1278 = vsub.f32 %v1276, %v1277
  %v1279 = vmax.f32 %v1278, 0.0
  %v1280 = vadd.f32 %v1279, 1e-05
  %v1281 = vrsqrt.pop %v1280
  %v1282 = vmul.f32 %v1183, %v1281
  %v1283 = vmul.f32 %v1282, %v1222
  %v1284 = vsub.f32 %v1184, %v1283
  %v1286 = vlaneseq
  %v1287 = vshrl.u32 %v1286, 7
  %v1288 = vsub.s32 0, %v1287
  %v1289 = vrot.slane %v1282, %v1288
  %v1291 = vmul.f32 %v1121, %v1289
  %v1292 = vmul.f32 %v1124, %v1289
  %v1293 = vmul.f32 %v1129, %v1289
  %v1294 = vmul.f32 %v1132, %v1289
  %v1295 = vmul.f32 %v1137, %v1289
  %v1296 = vmul.f32 %v1140, %v1289
  %v1297 = vmul.f32 %v1145, %v1289
  %v1298 = vmul.f32 %v1148, %v1289
  %v1299 = vmul.f32 %v1153, %v1289
  %v1300 = vmul.f32 %v1156, %v1289
  %v1301 = vmul.f32 %v1161, %v1289
  %v1302 = vmul.f32 %v1164, %v1289
  %v1303 = vmul.f32 %v1169, %v1289
  %v1304 = vmul.f32 %v1172, %v1289
  %v1305 = vmul.f32 %v1177, %v1289
  %v1306 = vmul.f32 %v1180, %v1289
  %v1308 = vlaneseq
  %v1309 = vshrl.u32 %v1308, 7
  %v1310 = vsub.s32 0, %v1309
  %v1311 = vrot.slane %v1284, %v1310
  %v1313 = vadd.f32 %v1291, %v1311
  %v1314 = vadd.f32 %v1292, %v1311
  %v1315 = vadd.f32 %v1293, %v1311
  %v1316 = vadd.f32 %v1294, %v1311
  %v1317 = vadd.f32 %v1295, %v1311
  %v1318 = vadd.f32 %v1296, %v1311
  %v1319 = vadd.f32 %v1297, %v1311
  %v1320 = vadd.f32 %v1298, %v1311
  %v1321 = vadd.f32 %v1299, %v1311
  %v1322 = vadd.f32 %v1300, %v1311
  %v1323 = vadd.f32 %v1301, %v1311
  %v1324 = vadd.f32 %v1302, %v1311
  %v1325 = vadd.f32 %v1303, %v1311
  %v1326 = vadd.f32 %v1304, %v1311
  %v1327 = vadd.f32 %v1305, %v1311
  %v1328 = vadd.f32 %v1306, %v1311
  %vm1329 = vcmp.ge.f32.partialorder %v1313, 0.0
  %vm1330 = vcmp.ge.f32.partialorder %v1314, 0.0
  %vm1331 = vcmp.ge.f32.partialorder %v1315, 0.0
  %vm1332 = vcmp.ge.f32.partialorder %v1316, 0.0
  %vm1333 = vcmp.ge.f32.partialorder %v1317, 0.0
  %vm1334 = vcmp.ge.f32.partialorder %v1318, 0.0
  %vm1335 = vcmp.ge.f32.partialorder %v1319, 0.0
  %vm1336 = vcmp.ge.f32.partialorder %v1320, 0.0
  %vm1337 = vcmp.ge.f32.partialorder %v1321, 0.0
  %vm1338 = vcmp.ge.f32.partialorder %v1322, 0.0
  %vm1339 = vcmp.ge.f32.partialorder %v1323, 0.0
  %vm1340 = vcmp.ge.f32.partialorder %v1324, 0.0
  %vm1341 = vcmp.ge.f32.partialorder %v1325, 0.0
  %vm1342 = vcmp.ge.f32.partialorder %v1326, 0.0
  %vm1343 = vcmp.ge.f32.partialorder %v1327, 0.0
  %vm1344 = vcmp.ge.f32.partialorder %v1328, 0.0
  %v1345 = vmul.f32 %v1313, 0.2
  %v1346 = vmul.f32 %v1314, 0.2
  %v1347 = vmul.f32 %v1315, 0.2
  %v1348 = vmul.f32 %v1316, 0.2
  %v1349 = vmul.f32 %v1317, 0.2
  %v1350 = vmul.f32 %v1318, 0.2
  %v1351 = vmul.f32 %v1319, 0.2
  %v1352 = vmul.f32 %v1320, 0.2
  %v1353 = vmul.f32 %v1321, 0.2
  %v1354 = vmul.f32 %v1322, 0.2
  %v1355 = vmul.f32 %v1323, 0.2
  %v1356 = vmul.f32 %v1324, 0.2
  %v1357 = vmul.f32 %v1325, 0.2
  %v1358 = vmul.f32 %v1326, 0.2
  %v1359 = vmul.f32 %v1327, 0.2
  %v1360 = vmul.f32 %v1328, 0.2
  %v1361 = vsel %vm1329, %v1313, %v1345
  %v1362 = vsel %vm1330, %v1314, %v1346
  %v1363 = vsel %vm1331, %v1315, %v1347
  %v1364 = vsel %vm1332, %v1316, %v1348
  %v1365 = vsel %vm1333, %v1317, %v1349
  %v1366 = vsel %vm1334, %v1318, %v1350
  %v1367 = vsel %vm1335, %v1319, %v1351
  %v1368 = vsel %vm1336, %v1320, %v1352
  %v1369 = vsel %vm1337, %v1321, %v1353
  %v1370 = vsel %vm1338, %v1322, %v1354
  %v1371 = vsel %vm1339, %v1323, %v1355
  %v1372 = vsel %vm1340, %v1324, %v1356
  %v1373 = vsel %vm1341, %v1325, %v1357
  %v1374 = vsel %vm1342, %v1326, %v1358
  %v1375 = vsel %vm1343, %v1327, %v1359
  %v1376 = vsel %vm1344, %v1328, %v1360
  %v1377 = vsel %vm754, %v1361, 0.0
  %v1378 = vsel %vm754, %v1363, 0.0
  %v1379 = vsel %vm754, %v1365, 0.0
  %v1380 = vsel %vm754, %v1367, 0.0
  %v1381 = vsel %vm754, %v1369, 0.0
  %v1382 = vsel %vm754, %v1371, 0.0
  %v1383 = vsel %vm754, %v1373, 0.0
  %v1384 = vsel %vm754, %v1375, 0.0
  %v1385 = vsel %vm754, %v1362, 0.0
  %v1386 = vsel %vm754, %v1364, 0.0
  %v1387 = vsel %vm754, %v1366, 0.0
  %v1388 = vsel %vm754, %v1368, 0.0
  %v1389 = vsel %vm754, %v1370, 0.0
  %v1390 = vsel %vm754, %v1372, 0.0
  %v1391 = vsel %vm754, %v1374, 0.0
  %v1392 = vsel %vm754, %v1376, 0.0
  %1401 = vrot.lane.b32.xlu0 %v1377, 64
  %v1402 = vpop.permute.xlu0 %1401
  %1403 = vrot.lane.b32.xlu0 %v1378, 64
  %v1404 = vpop.permute.xlu0 %1403
  %1405 = vrot.lane.b32.xlu0 %v1379, 64
  %v1406 = vpop.permute.xlu0 %1405
  %1407 = vrot.lane.b32.xlu0 %v1380, 64
  %v1408 = vpop.permute.xlu0 %1407
  %1409 = vrot.lane.b32.xlu0 %v1381, 64
  %v1410 = vpop.permute.xlu0 %1409
  %1411 = vrot.lane.b32.xlu0 %v1382, 64
  %v1412 = vpop.permute.xlu0 %1411
  %1413 = vrot.lane.b32.xlu0 %v1383, 64
  %v1414 = vpop.permute.xlu0 %1413
  %1415 = vrot.lane.b32.xlu0 %v1384, 64
  %v1416 = vpop.permute.xlu0 %1415
  %1425 = vrot.lane.b32.xlu0 0.0, 64
  %v1426 = vpop.permute.xlu0 %1425
  %v1428 = vsel %vm980, 0.0, %v1402
  %v1429 = vsel %vm980, %v1385, %v1404
  %v1430 = vsel %vm980, %v1386, %v1406
  %v1431 = vsel %vm980, %v1387, %v1408
  %v1432 = vsel %vm980, %v1388, %v1410
  %v1433 = vsel %vm980, %v1389, %v1412
  %v1434 = vsel %vm980, %v1390, %v1414
  %v1435 = vsel %vm980, %v1391, %v1416
  %v1436 = vsel %vm980, %v1392, %v1426
  %v1437 = vpack.c.bf16 %v1429, %v1428
  %v1438 = vpack.c.bf16 %v1430, %v1429
  %v1439 = vpack.c.bf16 %v1431, %v1430
  %v1440 = vpack.c.bf16 %v1432, %v1431
  %v1441 = vpack.c.bf16 %v1433, %v1432
  %v1442 = vpack.c.bf16 %v1434, %v1433
  %v1443 = vpack.c.bf16 %v1435, %v1434
  %v1444 = vpack.c.bf16 %v1436, %v1435
  %v1445 = vld [vmem:[%s7] sm:$0xf]
  %v1446 = vld [vmem:[%s7 + $0x4] sm:$0xf]
  %v1447 = vld [vmem:[%s7 + $0x8] sm:$0xf]
  %v1448 = vld [vmem:[%s7 + $0xc] sm:$0xf]
  %v1449 = vld [vmem:[%s7 + $0x10] sm:$0xf]
  %v1450 = vld [vmem:[%s7 + $0x14] sm:$0xf]
  %v1451 = vld [vmem:[%s7 + $0x18] sm:$0xf]
  %v1452 = vld [vmem:[%s7 + $0x1c] sm:$0xf]
  %v1453 = vld [vmem:[%s7 + $0x20] sm:$0xf]
  %v1454 = vld [vmem:[%s7 + $0x24] sm:$0xf]
  %v1455 = vld [vmem:[%s7 + $0x28] sm:$0xf]
  %v1456 = vld [vmem:[%s7 + $0x2c] sm:$0xf]
  %v1457 = vld [vmem:[%s7 + $0x30] sm:$0xf]
  %v1458 = vld [vmem:[%s7 + $0x34] sm:$0xf]
  %v1459 = vld [vmem:[%s7 + $0x38] sm:$0xf]
  %v1460 = vld [vmem:[%s7 + $0x3c] sm:$0xf]
  %v1461 = vld [vmem:[%s7 + $0x40] sm:$0xf]
  %v1462 = vld [vmem:[%s7 + $0x44] sm:$0xf]
  %v1463 = vld [vmem:[%s7 + $0x48] sm:$0xf]
  %v1464 = vld [vmem:[%s7 + $0x4c] sm:$0xf]
  %v1465 = vld [vmem:[%s7 + $0x50] sm:$0xf]
  %v1466 = vld [vmem:[%s7 + $0x54] sm:$0xf]
  %v1467 = vld [vmem:[%s7 + $0x58] sm:$0xf]
  %v1468 = vld [vmem:[%s7 + $0x5c] sm:$0xf]
  %v1469 = vld [vmem:[%s7 + $0x60] sm:$0xf]
  %v1470 = vld [vmem:[%s7 + $0x64] sm:$0xf]
  %v1471 = vld [vmem:[%s7 + $0x68] sm:$0xf]
  %v1472 = vld [vmem:[%s7 + $0x6c] sm:$0xf]
  %v1473 = vld [vmem:[%s7 + $0x70] sm:$0xf]
  %v1474 = vld [vmem:[%s7 + $0x74] sm:$0xf]
  %v1475 = vld [vmem:[%s7 + $0x78] sm:$0xf]
  %v1476 = vld [vmem:[%s7 + $0x7c] sm:$0xf]
  %v1509 = vunpack.c.l.b16 %v1445
  %v1510 = vunpack.c.l.b16 %v1446
  %v1511 = vunpack.c.l.b16 %v1447
  %v1512 = vunpack.c.l.b16 %v1448
  %v1513 = vunpack.c.l.b16 %v1449
  %v1514 = vunpack.c.l.b16 %v1450
  %v1515 = vunpack.c.l.b16 %v1451
  %v1516 = vunpack.c.l.b16 %v1452
  %v1517 = vunpack.c.l.b16 %v1453
  %v1518 = vunpack.c.l.b16 %v1454
  %v1519 = vunpack.c.l.b16 %v1455
  %v1520 = vunpack.c.l.b16 %v1456
  %v1521 = vunpack.c.l.b16 %v1457
  %v1522 = vunpack.c.l.b16 %v1458
  %v1523 = vunpack.c.l.b16 %v1459
  %v1524 = vunpack.c.l.b16 %v1460
  %v1525 = vunpack.c.l.b16 %v1461
  %v1526 = vunpack.c.l.b16 %v1462
  %v1527 = vunpack.c.l.b16 %v1463
  %v1528 = vunpack.c.l.b16 %v1464
  %v1529 = vunpack.c.l.b16 %v1465
  %v1530 = vunpack.c.l.b16 %v1466
  %v1531 = vunpack.c.l.b16 %v1467
  %v1532 = vunpack.c.l.b16 %v1468
  %v1533 = vunpack.c.l.b16 %v1469
  %v1534 = vunpack.c.l.b16 %v1470
  %v1535 = vunpack.c.l.b16 %v1471
  %v1536 = vunpack.c.l.b16 %v1472
  %v1537 = vunpack.c.l.b16 %v1473
  %v1538 = vunpack.c.l.b16 %v1474
  %v1539 = vunpack.c.l.b16 %v1475
  %v1540 = vunpack.c.l.b16 %v1476
  %v1541 = vpack.c.b16 %v1510, %v1509
  %v1542 = vpack.c.b16 %v1512, %v1511
  %v1543 = vpack.c.b16 %v1514, %v1513
  %v1544 = vpack.c.b16 %v1516, %v1515
  %v1545 = vpack.c.b16 %v1518, %v1517
  %v1546 = vpack.c.b16 %v1520, %v1519
  %v1547 = vpack.c.b16 %v1522, %v1521
  %v1548 = vpack.c.b16 %v1524, %v1523
  %v1549 = vpack.c.b16 %v1526, %v1525
  %v1550 = vpack.c.b16 %v1528, %v1527
  %v1551 = vpack.c.b16 %v1530, %v1529
  %v1552 = vpack.c.b16 %v1532, %v1531
  %v1553 = vpack.c.b16 %v1534, %v1533
  %v1554 = vpack.c.b16 %v1536, %v1535
  %v1555 = vpack.c.b16 %v1538, %v1537
  %v1556 = vpack.c.b16 %v1540, %v1539
  %1573 = vmatprep.subr.bf16.mxu0 0
  %1574 = vmatpush1.bf16.msra.mxu0 %v1541
  %1575 = vmatprep.subr.bf16.mxu0 0
  %1576 = vmatpush1.bf16.msra.mxu0 %v1542
  %1577 = vmatprep.subr.bf16.mxu0 0
  %1578 = vmatpush1.bf16.msra.mxu0 %v1543
  %1579 = vmatprep.subr.bf16.mxu0 0
  %1580 = vmatpush1.bf16.msra.mxu0 %v1544
  %1581 = vmatprep.subr.bf16.mxu0 0
  %1582 = vmatpush1.bf16.msra.mxu0 %v1545
  %1583 = vmatprep.subr.bf16.mxu0 0
  %1584 = vmatpush1.bf16.msra.mxu0 %v1546
  %1585 = vmatprep.subr.bf16.mxu0 0
  %1586 = vmatpush1.bf16.msra.mxu0 %v1547
  %1587 = vmatprep.subr.bf16.mxu0 0
  %1588 = vmatpush1.bf16.msra.mxu0 %v1548
  %1589 = vmatprep.subr.bf16.mxu0 0
  %1590 = vmatpush1.bf16.msra.mxu0 %v1549
  %1591 = vmatprep.subr.bf16.mxu0 0
  %1592 = vmatpush1.bf16.msra.mxu0 %v1550
  %1593 = vmatprep.subr.bf16.mxu0 0
  %1594 = vmatpush1.bf16.msra.mxu0 %v1551
  %1595 = vmatprep.subr.bf16.mxu0 0
  %1596 = vmatpush1.bf16.msra.mxu0 %v1552
  %1597 = vmatprep.subr.bf16.mxu0 0
  %1598 = vmatpush1.bf16.msra.mxu0 %v1553
  %1599 = vmatprep.subr.bf16.mxu0 0
  %1600 = vmatpush1.bf16.msra.mxu0 %v1554
  %1601 = vmatprep.subr.bf16.mxu0 0
  %1602 = vmatpush1.bf16.msra.mxu0 %v1555
  %1603 = vmatprep.subr.bf16.mxu0 0
  %1604 = vmatpush1.bf16.msra.mxu0 %v1556
  %1605 = vmatprep.mubr.bf16.mxu0 %v1438
  %1606 = vmatmul.mubr.bf16.gmra.mrb[0].mxu0 %v1437
  %v1607 = vpop.f32.mrb[0].mxu0
  %v1608 = vadd.f32 0.0, %v1607
  %v1609 = vpop.f32.mrb[0].mxu0
  %v1610 = vpop.f32.mrb[0].mxu0
  %v1611 = vadd.f32 0.0, %v1610
  %v1612 = vpop.f32.mrb[0].mxu0
  %1613 = vmatprep.mubr.bf16.mxu0 %v1440
  %1614 = vmatmul.mubr.bf16.gmra.mrb[0].mxu0 %v1439
  %v1615 = vpop.f32.mrb[0].mxu0
  %v1616 = vadd.f32 0.0, %v1615
  %v1617 = vpop.f32.mrb[0].mxu0
  %v1618 = vpop.f32.mrb[0].mxu0
  %v1619 = vadd.f32 0.0, %v1618
  %v1620 = vpop.f32.mrb[0].mxu0
  %1621 = vmatprep.mubr.bf16.mxu0 %v1442
  %1622 = vmatmul.mubr.bf16.gmra.mrb[0].mxu0 %v1441
  %v1623 = vpop.f32.mrb[0].mxu0
  %v1624 = vadd.f32 0.0, %v1623
  %v1625 = vpop.f32.mrb[0].mxu0
  %v1626 = vpop.f32.mrb[0].mxu0
  %v1627 = vadd.f32 0.0, %v1626
  %v1628 = vpop.f32.mrb[0].mxu0
  %1629 = vmatprep.mubr.bf16.mxu0 %v1444
  %1630 = vmatmul.mubr.bf16.gmra.mrb[0].mxu0 %v1443
  %v1631 = vpop.f32.mrb[0].mxu0
  %v1632 = vadd.f32 0.0, %v1631
  %v1633 = vpop.f32.mrb[0].mxu0
  %v1634 = vpop.f32.mrb[0].mxu0
  %v1635 = vadd.f32 0.0, %v1634
  %v1636 = vpop.f32.mrb[0].mxu0
  %1637 = vdwg.mxu0
  %v1638 = vld [vmem:[%s8] sm:$0x1]
  %v1639 = vld [vmem:[%s9] sm:$0x1]
  %v1640 = vadd.f32 %v1608, %v1611
  %v1641 = vadd.f32 %v1640, %v1616
  %v1642 = vadd.f32 %v1641, %v1619
  %v1643 = vadd.f32 %v1642, %v1624
  %v1644 = vadd.f32 %v1643, %v1627
  %v1645 = vadd.f32 %v1644, %v1632
  %v1646 = vadd.f32 %v1645, %v1635
  %v1647 = vrot.slane %v1646, 4
  %v1648 = vadd.f32 %v1646, %v1647
  %v1649 = vrot.slane %v1648, 2
  %v1650 = vadd.f32 %v1648, %v1649
  %v1651 = vrot.slane %v1650, 1
  %v1652 = vadd.f32 %v1650, %v1651
  %v1653 = vmul.f32 %v1652, 0.03125
  %v1654 = vmul.f32 %v1608, %v1608
  %v1655 = vmul.f32 %v1611, %v1611
  %v1656 = vmul.f32 %v1616, %v1616
  %v1657 = vmul.f32 %v1619, %v1619
  %v1658 = vmul.f32 %v1624, %v1624
  %v1659 = vmul.f32 %v1627, %v1627
  %v1660 = vmul.f32 %v1632, %v1632
  %v1661 = vmul.f32 %v1635, %v1635
  %v1662 = vadd.f32 %v1654, %v1655
  %v1663 = vadd.f32 %v1662, %v1656
  %v1664 = vadd.f32 %v1663, %v1657
  %v1665 = vadd.f32 %v1664, %v1658
  %v1666 = vadd.f32 %v1665, %v1659
  %v1667 = vadd.f32 %v1666, %v1660
  %v1668 = vadd.f32 %v1667, %v1661
  %v1669 = vrot.slane %v1668, 4
  %v1670 = vadd.f32 %v1668, %v1669
  %v1671 = vrot.slane %v1670, 2
  %v1672 = vadd.f32 %v1670, %v1671
  %v1673 = vrot.slane %v1672, 1
  %v1674 = vadd.f32 %v1672, %v1673
  %v1675 = vmul.f32 %v1674, 0.03125
  %v1676 = vmul.f32 %v1653, %v1653
  %v1677 = vsub.f32 %v1675, %v1676
  %v1678 = vmax.f32 %v1677, 0.0
  %v1679 = vadd.f32 %v1678, 1e-05
  %v1680 = vrsqrt.pop %v1679
  %v1681 = vmul.f32 %v1638, %v1680
  %v1682 = vmul.f32 %v1681, %v1653
  %v1683 = vsub.f32 %v1639, %v1682
  %v1685 = vlaneseq
  %v1686 = vshrl.u32 %v1685, 7
  %v1687 = vsub.s32 0, %v1686
  %v1688 = vrot.slane %v1681, %v1687
  %v1690 = vmul.f32 %v1608, %v1688
  %v1691 = vmul.f32 %v1611, %v1688
  %v1692 = vmul.f32 %v1616, %v1688
  %v1693 = vmul.f32 %v1619, %v1688
  %v1694 = vmul.f32 %v1624, %v1688
  %v1695 = vmul.f32 %v1627, %v1688
  %v1696 = vmul.f32 %v1632, %v1688
  %v1697 = vmul.f32 %v1635, %v1688
  %v1699 = vlaneseq
  %v1700 = vshrl.u32 %v1699, 7
  %v1701 = vsub.s32 0, %v1700
  %v1702 = vrot.slane %v1683, %v1701
  %v1704 = vadd.f32 %v1690, %v1702
  %v1705 = vadd.f32 %v1691, %v1702
  %v1706 = vadd.f32 %v1692, %v1702
  %v1707 = vadd.f32 %v1693, %v1702
  %v1708 = vadd.f32 %v1694, %v1702
  %v1709 = vadd.f32 %v1695, %v1702
  %v1710 = vadd.f32 %v1696, %v1702
  %v1711 = vadd.f32 %v1697, %v1702
  %vm1712 = vcmp.ge.f32.partialorder %v1704, 0.0
  %vm1713 = vcmp.ge.f32.partialorder %v1705, 0.0
  %vm1714 = vcmp.ge.f32.partialorder %v1706, 0.0
  %vm1715 = vcmp.ge.f32.partialorder %v1707, 0.0
  %vm1716 = vcmp.ge.f32.partialorder %v1708, 0.0
  %vm1717 = vcmp.ge.f32.partialorder %v1709, 0.0
  %vm1718 = vcmp.ge.f32.partialorder %v1710, 0.0
  %vm1719 = vcmp.ge.f32.partialorder %v1711, 0.0
  %v1720 = vmul.f32 %v1704, 0.2
  %v1721 = vmul.f32 %v1705, 0.2
  %v1722 = vmul.f32 %v1706, 0.2
  %v1723 = vmul.f32 %v1707, 0.2
  %v1724 = vmul.f32 %v1708, 0.2
  %v1725 = vmul.f32 %v1709, 0.2
  %v1726 = vmul.f32 %v1710, 0.2
  %v1727 = vmul.f32 %v1711, 0.2
  %v1728 = vsel %vm1712, %v1704, %v1720
  %v1729 = vsel %vm1713, %v1705, %v1721
  %v1730 = vsel %vm1714, %v1706, %v1722
  %v1731 = vsel %vm1715, %v1707, %v1723
  %v1732 = vsel %vm1716, %v1708, %v1724
  %v1733 = vsel %vm1717, %v1709, %v1725
  %v1734 = vsel %vm1718, %v1710, %v1726
  %v1735 = vsel %vm1719, %v1711, %v1727
  %v1736 = vpack.c.bf16 %v1728, %v1728
  %v1737 = vpack.c.bf16 %v1729, %v1729
  %v1738 = vpack.c.bf16 %v1730, %v1730
  %v1739 = vpack.c.bf16 %v1731, %v1731
  %v1740 = vpack.c.bf16 %v1732, %v1732
  %v1741 = vpack.c.bf16 %v1733, %v1733
  %v1742 = vpack.c.bf16 %v1734, %v1734
  %v1743 = vpack.c.bf16 %v1735, %v1735
  %v1744 = vld [vmem:[%s10] sm:$0xf]
  %v1745 = vld [vmem:[%s10 + $0x4] sm:$0xf]
  %v1746 = vld [vmem:[%s10 + $0x8] sm:$0xf]
  %v1747 = vld [vmem:[%s10 + $0xc] sm:$0xf]
  %v1748 = vld [vmem:[%s10 + $0x10] sm:$0xf]
  %v1749 = vld [vmem:[%s10 + $0x14] sm:$0xf]
  %v1750 = vld [vmem:[%s10 + $0x18] sm:$0xf]
  %v1751 = vld [vmem:[%s10 + $0x1c] sm:$0xf]
  %v1752 = vld [vmem:[%s10 + $0x20] sm:$0xf]
  %v1753 = vld [vmem:[%s10 + $0x24] sm:$0xf]
  %v1754 = vld [vmem:[%s10 + $0x28] sm:$0xf]
  %v1755 = vld [vmem:[%s10 + $0x2c] sm:$0xf]
  %v1756 = vld [vmem:[%s10 + $0x30] sm:$0xf]
  %v1757 = vld [vmem:[%s10 + $0x34] sm:$0xf]
  %v1758 = vld [vmem:[%s10 + $0x38] sm:$0xf]
  %v1759 = vld [vmem:[%s10 + $0x3c] sm:$0xf]
  %v1760 = vld [vmem:[%s10 + $0x40] sm:$0xf]
  %v1761 = vld [vmem:[%s10 + $0x44] sm:$0xf]
  %v1762 = vld [vmem:[%s10 + $0x48] sm:$0xf]
  %v1763 = vld [vmem:[%s10 + $0x4c] sm:$0xf]
  %v1764 = vld [vmem:[%s10 + $0x50] sm:$0xf]
  %v1765 = vld [vmem:[%s10 + $0x54] sm:$0xf]
  %v1766 = vld [vmem:[%s10 + $0x58] sm:$0xf]
  %v1767 = vld [vmem:[%s10 + $0x5c] sm:$0xf]
  %v1768 = vld [vmem:[%s10 + $0x60] sm:$0xf]
  %v1769 = vld [vmem:[%s10 + $0x64] sm:$0xf]
  %v1770 = vld [vmem:[%s10 + $0x68] sm:$0xf]
  %v1771 = vld [vmem:[%s10 + $0x6c] sm:$0xf]
  %v1772 = vld [vmem:[%s10 + $0x70] sm:$0xf]
  %v1773 = vld [vmem:[%s10 + $0x74] sm:$0xf]
  %v1774 = vld [vmem:[%s10 + $0x78] sm:$0xf]
  %v1775 = vld [vmem:[%s10 + $0x7c] sm:$0xf]
  %v1776 = vld [vmem:[%s10 + $0x80] sm:$0xf]
  %v1777 = vld [vmem:[%s10 + $0x84] sm:$0xf]
  %v1778 = vld [vmem:[%s10 + $0x88] sm:$0xf]
  %v1779 = vld [vmem:[%s10 + $0x8c] sm:$0xf]
  %v1780 = vld [vmem:[%s10 + $0x90] sm:$0xf]
  %v1781 = vld [vmem:[%s10 + $0x94] sm:$0xf]
  %v1782 = vld [vmem:[%s10 + $0x98] sm:$0xf]
  %v1783 = vld [vmem:[%s10 + $0x9c] sm:$0xf]
  %v1784 = vld [vmem:[%s10 + $0xa0] sm:$0xf]
  %v1785 = vld [vmem:[%s10 + $0xa4] sm:$0xf]
  %v1786 = vld [vmem:[%s10 + $0xa8] sm:$0xf]
  %v1787 = vld [vmem:[%s10 + $0xac] sm:$0xf]
  %v1788 = vld [vmem:[%s10 + $0xb0] sm:$0xf]
  %v1789 = vld [vmem:[%s10 + $0xb4] sm:$0xf]
  %v1790 = vld [vmem:[%s10 + $0xb8] sm:$0xf]
  %v1791 = vld [vmem:[%s10 + $0xbc] sm:$0xf]
  %v1792 = vld [vmem:[%s10 + $0xc0] sm:$0xf]
  %v1793 = vld [vmem:[%s10 + $0xc4] sm:$0xf]
  %v1794 = vld [vmem:[%s10 + $0xc8] sm:$0xf]
  %v1795 = vld [vmem:[%s10 + $0xcc] sm:$0xf]
  %v1796 = vld [vmem:[%s10 + $0xd0] sm:$0xf]
  %v1797 = vld [vmem:[%s10 + $0xd4] sm:$0xf]
  %v1798 = vld [vmem:[%s10 + $0xd8] sm:$0xf]
  %v1799 = vld [vmem:[%s10 + $0xdc] sm:$0xf]
  %v1800 = vld [vmem:[%s10 + $0xe0] sm:$0xf]
  %v1801 = vld [vmem:[%s10 + $0xe4] sm:$0xf]
  %v1802 = vld [vmem:[%s10 + $0xe8] sm:$0xf]
  %v1803 = vld [vmem:[%s10 + $0xec] sm:$0xf]
  %v1804 = vld [vmem:[%s10 + $0xf0] sm:$0xf]
  %v1805 = vld [vmem:[%s10 + $0xf4] sm:$0xf]
  %v1806 = vld [vmem:[%s10 + $0xf8] sm:$0xf]
  %v1807 = vld [vmem:[%s10 + $0xfc] sm:$0xf]
  %v1808 = vld [vmem:[%s10 + $0x100] sm:$0xf]
  %v1809 = vld [vmem:[%s10 + $0x104] sm:$0xf]
  %v1810 = vld [vmem:[%s10 + $0x108] sm:$0xf]
  %v1811 = vld [vmem:[%s10 + $0x10c] sm:$0xf]
  %v1812 = vld [vmem:[%s10 + $0x110] sm:$0xf]
  %v1813 = vld [vmem:[%s10 + $0x114] sm:$0xf]
  %v1814 = vld [vmem:[%s10 + $0x118] sm:$0xf]
  %v1815 = vld [vmem:[%s10 + $0x11c] sm:$0xf]
  %v1816 = vld [vmem:[%s10 + $0x120] sm:$0xf]
  %v1817 = vld [vmem:[%s10 + $0x124] sm:$0xf]
  %v1818 = vld [vmem:[%s10 + $0x128] sm:$0xf]
  %v1819 = vld [vmem:[%s10 + $0x12c] sm:$0xf]
  %v1820 = vld [vmem:[%s10 + $0x130] sm:$0xf]
  %v1821 = vld [vmem:[%s10 + $0x134] sm:$0xf]
  %v1822 = vld [vmem:[%s10 + $0x138] sm:$0xf]
  %v1823 = vld [vmem:[%s10 + $0x13c] sm:$0xf]
  %v1824 = vld [vmem:[%s10 + $0x140] sm:$0xf]
  %v1825 = vld [vmem:[%s10 + $0x144] sm:$0xf]
  %v1826 = vld [vmem:[%s10 + $0x148] sm:$0xf]
  %v1827 = vld [vmem:[%s10 + $0x14c] sm:$0xf]
  %v1828 = vld [vmem:[%s10 + $0x150] sm:$0xf]
  %v1829 = vld [vmem:[%s10 + $0x154] sm:$0xf]
  %v1830 = vld [vmem:[%s10 + $0x158] sm:$0xf]
  %v1831 = vld [vmem:[%s10 + $0x15c] sm:$0xf]
  %v1832 = vld [vmem:[%s10 + $0x160] sm:$0xf]
  %v1833 = vld [vmem:[%s10 + $0x164] sm:$0xf]
  %v1834 = vld [vmem:[%s10 + $0x168] sm:$0xf]
  %v1835 = vld [vmem:[%s10 + $0x16c] sm:$0xf]
  %v1836 = vld [vmem:[%s10 + $0x170] sm:$0xf]
  %v1837 = vld [vmem:[%s10 + $0x174] sm:$0xf]
  %v1838 = vld [vmem:[%s10 + $0x178] sm:$0xf]
  %v1839 = vld [vmem:[%s10 + $0x17c] sm:$0xf]
  %v1840 = vld [vmem:[%s10 + $0x180] sm:$0xf]
  %v1841 = vld [vmem:[%s10 + $0x184] sm:$0xf]
  %v1842 = vld [vmem:[%s10 + $0x188] sm:$0xf]
  %v1843 = vld [vmem:[%s10 + $0x18c] sm:$0xf]
  %v1844 = vld [vmem:[%s10 + $0x190] sm:$0xf]
  %v1845 = vld [vmem:[%s10 + $0x194] sm:$0xf]
  %v1846 = vld [vmem:[%s10 + $0x198] sm:$0xf]
  %v1847 = vld [vmem:[%s10 + $0x19c] sm:$0xf]
  %v1848 = vld [vmem:[%s10 + $0x1a0] sm:$0xf]
  %v1849 = vld [vmem:[%s10 + $0x1a4] sm:$0xf]
  %v1850 = vld [vmem:[%s10 + $0x1a8] sm:$0xf]
  %v1851 = vld [vmem:[%s10 + $0x1ac] sm:$0xf]
  %v1852 = vld [vmem:[%s10 + $0x1b0] sm:$0xf]
  %v1853 = vld [vmem:[%s10 + $0x1b4] sm:$0xf]
  %v1854 = vld [vmem:[%s10 + $0x1b8] sm:$0xf]
  %v1855 = vld [vmem:[%s10 + $0x1bc] sm:$0xf]
  %v1856 = vld [vmem:[%s10 + $0x1c0] sm:$0xf]
  %v1857 = vld [vmem:[%s10 + $0x1c4] sm:$0xf]
  %v1858 = vld [vmem:[%s10 + $0x1c8] sm:$0xf]
  %v1859 = vld [vmem:[%s10 + $0x1cc] sm:$0xf]
  %v1860 = vld [vmem:[%s10 + $0x1d0] sm:$0xf]
  %v1861 = vld [vmem:[%s10 + $0x1d4] sm:$0xf]
  %v1862 = vld [vmem:[%s10 + $0x1d8] sm:$0xf]
  %v1863 = vld [vmem:[%s10 + $0x1dc] sm:$0xf]
  %v1864 = vld [vmem:[%s10 + $0x1e0] sm:$0xf]
  %v1865 = vld [vmem:[%s10 + $0x1e4] sm:$0xf]
  %v1866 = vld [vmem:[%s10 + $0x1e8] sm:$0xf]
  %v1867 = vld [vmem:[%s10 + $0x1ec] sm:$0xf]
  %v1868 = vld [vmem:[%s10 + $0x1f0] sm:$0xf]
  %v1869 = vld [vmem:[%s10 + $0x1f4] sm:$0xf]
  %v1870 = vld [vmem:[%s10 + $0x1f8] sm:$0xf]
  %v1871 = vld [vmem:[%s10 + $0x1fc] sm:$0xf]
  %v1888 = vunpack.c.l.b16 %v1744
  %v1889 = vunpack.c.l.b16 %v1745
  %v1890 = vunpack.c.l.b16 %v1746
  %v1891 = vunpack.c.l.b16 %v1747
  %v1892 = vunpack.c.l.b16 %v1748
  %v1893 = vunpack.c.l.b16 %v1749
  %v1894 = vunpack.c.l.b16 %v1750
  %v1895 = vunpack.c.l.b16 %v1751
  %v1896 = vunpack.c.l.b16 %v1752
  %v1897 = vunpack.c.l.b16 %v1753
  %v1898 = vunpack.c.l.b16 %v1754
  %v1899 = vunpack.c.l.b16 %v1755
  %v1900 = vunpack.c.l.b16 %v1756
  %v1901 = vunpack.c.l.b16 %v1757
  %v1902 = vunpack.c.l.b16 %v1758
  %v1903 = vunpack.c.l.b16 %v1759
  %v1904 = vpack.c.b16 %v1889, %v1888
  %v1905 = vpack.c.b16 %v1891, %v1890
  %v1906 = vpack.c.b16 %v1893, %v1892
  %v1907 = vpack.c.b16 %v1895, %v1894
  %v1908 = vpack.c.b16 %v1897, %v1896
  %v1909 = vpack.c.b16 %v1899, %v1898
  %v1910 = vpack.c.b16 %v1901, %v1900
  %v1911 = vpack.c.b16 %v1903, %v1902
  %1920 = vmatprep.subr.bf16.mxu0 0
  %1921 = vmatpush1.bf16.msra.mxu0 %v1904
  %1922 = vmatprep.subr.bf16.mxu0 0
  %1923 = vmatpush1.bf16.msra.mxu0 %v1905
  %1924 = vmatprep.subr.bf16.mxu0 0
  %1925 = vmatpush1.bf16.msra.mxu0 %v1906
  %1926 = vmatprep.subr.bf16.mxu0 0
  %1927 = vmatpush1.bf16.msra.mxu0 %v1907
  %1928 = vmatprep.subr.bf16.mxu0 0
  %1929 = vmatpush1.bf16.msra.mxu0 %v1908
  %1930 = vmatprep.subr.bf16.mxu0 0
  %1931 = vmatpush1.bf16.msra.mxu0 %v1909
  %1932 = vmatprep.subr.bf16.mxu0 0
  %1933 = vmatpush1.bf16.msra.mxu0 %v1910
  %1934 = vmatprep.subr.bf16.mxu0 0
  %1935 = vmatpush1.bf16.msra.mxu0 %v1911
  %1936 = vmatprep.subr.bf16.mxu0 0
  %1937 = vmatpush1.bf16.msra.mxu0 0
  %1938 = vmatprep.subr.bf16.mxu0 0
  %1939 = vmatpush1.bf16.msra.mxu0 0
  %1940 = vmatprep.subr.bf16.mxu0 0
  %1941 = vmatpush1.bf16.msra.mxu0 0
  %1942 = vmatprep.subr.bf16.mxu0 0
  %1943 = vmatpush1.bf16.msra.mxu0 0
  %1944 = vmatprep.subr.bf16.mxu0 0
  %1945 = vmatpush1.bf16.msra.mxu0 0
  %1946 = vmatprep.subr.bf16.mxu0 0
  %1947 = vmatpush1.bf16.msra.mxu0 0
  %1948 = vmatprep.subr.bf16.mxu0 0
  %1949 = vmatpush1.bf16.msra.mxu0 0
  %1950 = vmatprep.subr.bf16.mxu0 0
  %1951 = vmatpush1.bf16.msra.mxu0 0
  %1952 = vmatprep.mubr.bf16.mxu0 0
  %1953 = vmatmul.mubr.bf16.gmra.mrb[0].mxu0 %v1736
  %v1954 = vpop.f32.mrb[0].mxu0
  %v1955 = vadd.f32 0.0, %v1954
  %v1956 = vpop.f32.mrb[0].mxu0
  %v1957 = vpop.f32.mrb[0].mxu0
  %v1958 = vpop.f32.mrb[0].mxu0
  %1959 = vdwg.mxu0
  %v1976 = vunpack.c.l.b16 %v1760
  %v1977 = vunpack.c.l.b16 %v1761
  %v1978 = vunpack.c.l.b16 %v1762
  %v1979 = vunpack.c.l.b16 %v1763
  %v1980 = vunpack.c.l.b16 %v1764
  %v1981 = vunpack.c.l.b16 %v1765
  %v1982 = vunpack.c.l.b16 %v1766
  %v1983 = vunpack.c.l.b16 %v1767
  %v1984 = vunpack.c.l.b16 %v1768
  %v1985 = vunpack.c.l.b16 %v1769
  %v1986 = vunpack.c.l.b16 %v1770
  %v1987 = vunpack.c.l.b16 %v1771
  %v1988 = vunpack.c.l.b16 %v1772
  %v1989 = vunpack.c.l.b16 %v1773
  %v1990 = vunpack.c.l.b16 %v1774
  %v1991 = vunpack.c.l.b16 %v1775
  %v1992 = vpack.c.b16 %v1977, %v1976
  %v1993 = vpack.c.b16 %v1979, %v1978
  %v1994 = vpack.c.b16 %v1981, %v1980
  %v1995 = vpack.c.b16 %v1983, %v1982
  %v1996 = vpack.c.b16 %v1985, %v1984
  %v1997 = vpack.c.b16 %v1987, %v1986
  %v1998 = vpack.c.b16 %v1989, %v1988
  %v1999 = vpack.c.b16 %v1991, %v1990
  %2008 = vmatprep.subr.bf16.mxu0 0
  %2009 = vmatpush1.bf16.msra.mxu0 %v1992
  %2010 = vmatprep.subr.bf16.mxu0 0
  %2011 = vmatpush1.bf16.msra.mxu0 %v1993
  %2012 = vmatprep.subr.bf16.mxu0 0
  %2013 = vmatpush1.bf16.msra.mxu0 %v1994
  %2014 = vmatprep.subr.bf16.mxu0 0
  %2015 = vmatpush1.bf16.msra.mxu0 %v1995
  %2016 = vmatprep.subr.bf16.mxu0 0
  %2017 = vmatpush1.bf16.msra.mxu0 %v1996
  %2018 = vmatprep.subr.bf16.mxu0 0
  %2019 = vmatpush1.bf16.msra.mxu0 %v1997
  %2020 = vmatprep.subr.bf16.mxu0 0
  %2021 = vmatpush1.bf16.msra.mxu0 %v1998
  %2022 = vmatprep.subr.bf16.mxu0 0
  %2023 = vmatpush1.bf16.msra.mxu0 %v1999
  %2024 = vmatprep.subr.bf16.mxu0 0
  %2025 = vmatpush1.bf16.msra.mxu0 0
  %2026 = vmatprep.subr.bf16.mxu0 0
  %2027 = vmatpush1.bf16.msra.mxu0 0
  %2028 = vmatprep.subr.bf16.mxu0 0
  %2029 = vmatpush1.bf16.msra.mxu0 0
  %2030 = vmatprep.subr.bf16.mxu0 0
  %2031 = vmatpush1.bf16.msra.mxu0 0
  %2032 = vmatprep.subr.bf16.mxu0 0
  %2033 = vmatpush1.bf16.msra.mxu0 0
  %2034 = vmatprep.subr.bf16.mxu0 0
  %2035 = vmatpush1.bf16.msra.mxu0 0
  %2036 = vmatprep.subr.bf16.mxu0 0
  %2037 = vmatpush1.bf16.msra.mxu0 0
  %2038 = vmatprep.subr.bf16.mxu0 0
  %2039 = vmatpush1.bf16.msra.mxu0 0
  %2040 = vmatprep.mubr.bf16.mxu0 0
  %2041 = vmatmul.mubr.bf16.gmra.mrb[0].mxu0 %v1737
  %v2042 = vpop.f32.mrb[0].mxu0
  %v2043 = vadd.f32 0.0, %v2042
  %v2044 = vpop.f32.mrb[0].mxu0
  %v2045 = vpop.f32.mrb[0].mxu0
  %v2046 = vpop.f32.mrb[0].mxu0
  %2047 = vdwg.mxu0
  %v2064 = vunpack.c.l.b16 %v1776
  %v2065 = vunpack.c.l.b16 %v1777
  %v2066 = vunpack.c.l.b16 %v1778
  %v2067 = vunpack.c.l.b16 %v1779
  %v2068 = vunpack.c.l.b16 %v1780
  %v2069 = vunpack.c.l.b16 %v1781
  %v2070 = vunpack.c.l.b16 %v1782
  %v2071 = vunpack.c.l.b16 %v1783
  %v2072 = vunpack.c.l.b16 %v1784
  %v2073 = vunpack.c.l.b16 %v1785
  %v2074 = vunpack.c.l.b16 %v1786
  %v2075 = vunpack.c.l.b16 %v1787
  %v2076 = vunpack.c.l.b16 %v1788
  %v2077 = vunpack.c.l.b16 %v1789
  %v2078 = vunpack.c.l.b16 %v1790
  %v2079 = vunpack.c.l.b16 %v1791
  %v2080 = vpack.c.b16 %v2065, %v2064
  %v2081 = vpack.c.b16 %v2067, %v2066
  %v2082 = vpack.c.b16 %v2069, %v2068
  %v2083 = vpack.c.b16 %v2071, %v2070
  %v2084 = vpack.c.b16 %v2073, %v2072
  %v2085 = vpack.c.b16 %v2075, %v2074
  %v2086 = vpack.c.b16 %v2077, %v2076
  %v2087 = vpack.c.b16 %v2079, %v2078
  %2096 = vmatprep.subr.bf16.mxu0 0
  %2097 = vmatpush1.bf16.msra.mxu0 %v2080
  %2098 = vmatprep.subr.bf16.mxu0 0
  %2099 = vmatpush1.bf16.msra.mxu0 %v2081
  %2100 = vmatprep.subr.bf16.mxu0 0
  %2101 = vmatpush1.bf16.msra.mxu0 %v2082
  %2102 = vmatprep.subr.bf16.mxu0 0
  %2103 = vmatpush1.bf16.msra.mxu0 %v2083
  %2104 = vmatprep.subr.bf16.mxu0 0
  %2105 = vmatpush1.bf16.msra.mxu0 %v2084
  %2106 = vmatprep.subr.bf16.mxu0 0
  %2107 = vmatpush1.bf16.msra.mxu0 %v2085
  %2108 = vmatprep.subr.bf16.mxu0 0
  %2109 = vmatpush1.bf16.msra.mxu0 %v2086
  %2110 = vmatprep.subr.bf16.mxu0 0
  %2111 = vmatpush1.bf16.msra.mxu0 %v2087
  %2112 = vmatprep.subr.bf16.mxu0 0
  %2113 = vmatpush1.bf16.msra.mxu0 0
  %2114 = vmatprep.subr.bf16.mxu0 0
  %2115 = vmatpush1.bf16.msra.mxu0 0
  %2116 = vmatprep.subr.bf16.mxu0 0
  %2117 = vmatpush1.bf16.msra.mxu0 0
  %2118 = vmatprep.subr.bf16.mxu0 0
  %2119 = vmatpush1.bf16.msra.mxu0 0
  %2120 = vmatprep.subr.bf16.mxu0 0
  %2121 = vmatpush1.bf16.msra.mxu0 0
  %2122 = vmatprep.subr.bf16.mxu0 0
  %2123 = vmatpush1.bf16.msra.mxu0 0
  %2124 = vmatprep.subr.bf16.mxu0 0
  %2125 = vmatpush1.bf16.msra.mxu0 0
  %2126 = vmatprep.subr.bf16.mxu0 0
  %2127 = vmatpush1.bf16.msra.mxu0 0
  %2128 = vmatprep.mubr.bf16.mxu0 0
  %2129 = vmatmul.mubr.bf16.gmra.mrb[0].mxu0 %v1738
  %v2130 = vpop.f32.mrb[0].mxu0
  %v2131 = vadd.f32 0.0, %v2130
  %v2132 = vpop.f32.mrb[0].mxu0
  %v2133 = vpop.f32.mrb[0].mxu0
  %v2134 = vpop.f32.mrb[0].mxu0
  %2135 = vdwg.mxu0
  %v2152 = vunpack.c.l.b16 %v1792
  %v2153 = vunpack.c.l.b16 %v1793
  %v2154 = vunpack.c.l.b16 %v1794
  %v2155 = vunpack.c.l.b16 %v1795
  %v2156 = vunpack.c.l.b16 %v1796
  %v2157 = vunpack.c.l.b16 %v1797
  %v2158 = vunpack.c.l.b16 %v1798
  %v2159 = vunpack.c.l.b16 %v1799
  %v2160 = vunpack.c.l.b16 %v1800
  %v2161 = vunpack.c.l.b16 %v1801
  %v2162 = vunpack.c.l.b16 %v1802
  %v2163 = vunpack.c.l.b16 %v1803
  %v2164 = vunpack.c.l.b16 %v1804
  %v2165 = vunpack.c.l.b16 %v1805
  %v2166 = vunpack.c.l.b16 %v1806
  %v2167 = vunpack.c.l.b16 %v1807
  %v2168 = vpack.c.b16 %v2153, %v2152
  %v2169 = vpack.c.b16 %v2155, %v2154
  %v2170 = vpack.c.b16 %v2157, %v2156
  %v2171 = vpack.c.b16 %v2159, %v2158
  %v2172 = vpack.c.b16 %v2161, %v2160
  %v2173 = vpack.c.b16 %v2163, %v2162
  %v2174 = vpack.c.b16 %v2165, %v2164
  %v2175 = vpack.c.b16 %v2167, %v2166
  %2184 = vmatprep.subr.bf16.mxu0 0
  %2185 = vmatpush1.bf16.msra.mxu0 %v2168
  %2186 = vmatprep.subr.bf16.mxu0 0
  %2187 = vmatpush1.bf16.msra.mxu0 %v2169
  %2188 = vmatprep.subr.bf16.mxu0 0
  %2189 = vmatpush1.bf16.msra.mxu0 %v2170
  %2190 = vmatprep.subr.bf16.mxu0 0
  %2191 = vmatpush1.bf16.msra.mxu0 %v2171
  %2192 = vmatprep.subr.bf16.mxu0 0
  %2193 = vmatpush1.bf16.msra.mxu0 %v2172
  %2194 = vmatprep.subr.bf16.mxu0 0
  %2195 = vmatpush1.bf16.msra.mxu0 %v2173
  %2196 = vmatprep.subr.bf16.mxu0 0
  %2197 = vmatpush1.bf16.msra.mxu0 %v2174
  %2198 = vmatprep.subr.bf16.mxu0 0
  %2199 = vmatpush1.bf16.msra.mxu0 %v2175
  %2200 = vmatprep.subr.bf16.mxu0 0
  %2201 = vmatpush1.bf16.msra.mxu0 0
  %2202 = vmatprep.subr.bf16.mxu0 0
  %2203 = vmatpush1.bf16.msra.mxu0 0
  %2204 = vmatprep.subr.bf16.mxu0 0
  %2205 = vmatpush1.bf16.msra.mxu0 0
  %2206 = vmatprep.subr.bf16.mxu0 0
  %2207 = vmatpush1.bf16.msra.mxu0 0
  %2208 = vmatprep.subr.bf16.mxu0 0
  %2209 = vmatpush1.bf16.msra.mxu0 0
  %2210 = vmatprep.subr.bf16.mxu0 0
  %2211 = vmatpush1.bf16.msra.mxu0 0
  %2212 = vmatprep.subr.bf16.mxu0 0
  %2213 = vmatpush1.bf16.msra.mxu0 0
  %2214 = vmatprep.subr.bf16.mxu0 0
  %2215 = vmatpush1.bf16.msra.mxu0 0
  %2216 = vmatprep.mubr.bf16.mxu0 0
  %2217 = vmatmul.mubr.bf16.gmra.mrb[0].mxu0 %v1739
  %v2218 = vpop.f32.mrb[0].mxu0
  %v2219 = vadd.f32 0.0, %v2218
  %v2220 = vpop.f32.mrb[0].mxu0
  %v2221 = vpop.f32.mrb[0].mxu0
  %v2222 = vpop.f32.mrb[0].mxu0
  %2223 = vdwg.mxu0
  %v2240 = vunpack.c.l.b16 %v1808
  %v2241 = vunpack.c.l.b16 %v1809
  %v2242 = vunpack.c.l.b16 %v1810
  %v2243 = vunpack.c.l.b16 %v1811
  %v2244 = vunpack.c.l.b16 %v1812
  %v2245 = vunpack.c.l.b16 %v1813
  %v2246 = vunpack.c.l.b16 %v1814
  %v2247 = vunpack.c.l.b16 %v1815
  %v2248 = vunpack.c.l.b16 %v1816
  %v2249 = vunpack.c.l.b16 %v1817
  %v2250 = vunpack.c.l.b16 %v1818
  %v2251 = vunpack.c.l.b16 %v1819
  %v2252 = vunpack.c.l.b16 %v1820
  %v2253 = vunpack.c.l.b16 %v1821
  %v2254 = vunpack.c.l.b16 %v1822
  %v2255 = vunpack.c.l.b16 %v1823
  %v2256 = vpack.c.b16 %v2241, %v2240
  %v2257 = vpack.c.b16 %v2243, %v2242
  %v2258 = vpack.c.b16 %v2245, %v2244
  %v2259 = vpack.c.b16 %v2247, %v2246
  %v2260 = vpack.c.b16 %v2249, %v2248
  %v2261 = vpack.c.b16 %v2251, %v2250
  %v2262 = vpack.c.b16 %v2253, %v2252
  %v2263 = vpack.c.b16 %v2255, %v2254
  %2272 = vmatprep.subr.bf16.mxu0 0
  %2273 = vmatpush1.bf16.msra.mxu0 %v2256
  %2274 = vmatprep.subr.bf16.mxu0 0
  %2275 = vmatpush1.bf16.msra.mxu0 %v2257
  %2276 = vmatprep.subr.bf16.mxu0 0
  %2277 = vmatpush1.bf16.msra.mxu0 %v2258
  %2278 = vmatprep.subr.bf16.mxu0 0
  %2279 = vmatpush1.bf16.msra.mxu0 %v2259
  %2280 = vmatprep.subr.bf16.mxu0 0
  %2281 = vmatpush1.bf16.msra.mxu0 %v2260
  %2282 = vmatprep.subr.bf16.mxu0 0
  %2283 = vmatpush1.bf16.msra.mxu0 %v2261
  %2284 = vmatprep.subr.bf16.mxu0 0
  %2285 = vmatpush1.bf16.msra.mxu0 %v2262
  %2286 = vmatprep.subr.bf16.mxu0 0
  %2287 = vmatpush1.bf16.msra.mxu0 %v2263
  %2288 = vmatprep.subr.bf16.mxu0 0
  %2289 = vmatpush1.bf16.msra.mxu0 0
  %2290 = vmatprep.subr.bf16.mxu0 0
  %2291 = vmatpush1.bf16.msra.mxu0 0
  %2292 = vmatprep.subr.bf16.mxu0 0
  %2293 = vmatpush1.bf16.msra.mxu0 0
  %2294 = vmatprep.subr.bf16.mxu0 0
  %2295 = vmatpush1.bf16.msra.mxu0 0
  %2296 = vmatprep.subr.bf16.mxu0 0
  %2297 = vmatpush1.bf16.msra.mxu0 0
  %2298 = vmatprep.subr.bf16.mxu0 0
  %2299 = vmatpush1.bf16.msra.mxu0 0
  %2300 = vmatprep.subr.bf16.mxu0 0
  %2301 = vmatpush1.bf16.msra.mxu0 0
  %2302 = vmatprep.subr.bf16.mxu0 0
  %2303 = vmatpush1.bf16.msra.mxu0 0
  %2304 = vmatprep.mubr.bf16.mxu0 0
  %2305 = vmatmul.mubr.bf16.gmra.mrb[0].mxu0 %v1740
  %v2306 = vpop.f32.mrb[0].mxu0
  %v2307 = vadd.f32 0.0, %v2306
  %v2308 = vpop.f32.mrb[0].mxu0
  %v2309 = vpop.f32.mrb[0].mxu0
  %v2310 = vpop.f32.mrb[0].mxu0
  %2311 = vdwg.mxu0
  %v2328 = vunpack.c.l.b16 %v1824
  %v2329 = vunpack.c.l.b16 %v1825
  %v2330 = vunpack.c.l.b16 %v1826
  %v2331 = vunpack.c.l.b16 %v1827
  %v2332 = vunpack.c.l.b16 %v1828
  %v2333 = vunpack.c.l.b16 %v1829
  %v2334 = vunpack.c.l.b16 %v1830
  %v2335 = vunpack.c.l.b16 %v1831
  %v2336 = vunpack.c.l.b16 %v1832
  %v2337 = vunpack.c.l.b16 %v1833
  %v2338 = vunpack.c.l.b16 %v1834
  %v2339 = vunpack.c.l.b16 %v1835
  %v2340 = vunpack.c.l.b16 %v1836
  %v2341 = vunpack.c.l.b16 %v1837
  %v2342 = vunpack.c.l.b16 %v1838
  %v2343 = vunpack.c.l.b16 %v1839
  %v2344 = vpack.c.b16 %v2329, %v2328
  %v2345 = vpack.c.b16 %v2331, %v2330
  %v2346 = vpack.c.b16 %v2333, %v2332
  %v2347 = vpack.c.b16 %v2335, %v2334
  %v2348 = vpack.c.b16 %v2337, %v2336
  %v2349 = vpack.c.b16 %v2339, %v2338
  %v2350 = vpack.c.b16 %v2341, %v2340
  %v2351 = vpack.c.b16 %v2343, %v2342
  %2360 = vmatprep.subr.bf16.mxu0 0
  %2361 = vmatpush1.bf16.msra.mxu0 %v2344
  %2362 = vmatprep.subr.bf16.mxu0 0
  %2363 = vmatpush1.bf16.msra.mxu0 %v2345
  %2364 = vmatprep.subr.bf16.mxu0 0
  %2365 = vmatpush1.bf16.msra.mxu0 %v2346
  %2366 = vmatprep.subr.bf16.mxu0 0
  %2367 = vmatpush1.bf16.msra.mxu0 %v2347
  %2368 = vmatprep.subr.bf16.mxu0 0
  %2369 = vmatpush1.bf16.msra.mxu0 %v2348
  %2370 = vmatprep.subr.bf16.mxu0 0
  %2371 = vmatpush1.bf16.msra.mxu0 %v2349
  %2372 = vmatprep.subr.bf16.mxu0 0
  %2373 = vmatpush1.bf16.msra.mxu0 %v2350
  %2374 = vmatprep.subr.bf16.mxu0 0
  %2375 = vmatpush1.bf16.msra.mxu0 %v2351
  %2376 = vmatprep.subr.bf16.mxu0 0
  %2377 = vmatpush1.bf16.msra.mxu0 0
  %2378 = vmatprep.subr.bf16.mxu0 0
  %2379 = vmatpush1.bf16.msra.mxu0 0
  %2380 = vmatprep.subr.bf16.mxu0 0
  %2381 = vmatpush1.bf16.msra.mxu0 0
  %2382 = vmatprep.subr.bf16.mxu0 0
  %2383 = vmatpush1.bf16.msra.mxu0 0
  %2384 = vmatprep.subr.bf16.mxu0 0
  %2385 = vmatpush1.bf16.msra.mxu0 0
  %2386 = vmatprep.subr.bf16.mxu0 0
  %2387 = vmatpush1.bf16.msra.mxu0 0
  %2388 = vmatprep.subr.bf16.mxu0 0
  %2389 = vmatpush1.bf16.msra.mxu0 0
  %2390 = vmatprep.subr.bf16.mxu0 0
  %2391 = vmatpush1.bf16.msra.mxu0 0
  %2392 = vmatprep.mubr.bf16.mxu0 0
  %2393 = vmatmul.mubr.bf16.gmra.mrb[0].mxu0 %v1741
  %v2394 = vpop.f32.mrb[0].mxu0
  %v2395 = vadd.f32 0.0, %v2394
  %v2396 = vpop.f32.mrb[0].mxu0
  %v2397 = vpop.f32.mrb[0].mxu0
  %v2398 = vpop.f32.mrb[0].mxu0
  %2399 = vdwg.mxu0
  %v2416 = vunpack.c.l.b16 %v1840
  %v2417 = vunpack.c.l.b16 %v1841
  %v2418 = vunpack.c.l.b16 %v1842
  %v2419 = vunpack.c.l.b16 %v1843
  %v2420 = vunpack.c.l.b16 %v1844
  %v2421 = vunpack.c.l.b16 %v1845
  %v2422 = vunpack.c.l.b16 %v1846
  %v2423 = vunpack.c.l.b16 %v1847
  %v2424 = vunpack.c.l.b16 %v1848
  %v2425 = vunpack.c.l.b16 %v1849
  %v2426 = vunpack.c.l.b16 %v1850
  %v2427 = vunpack.c.l.b16 %v1851
  %v2428 = vunpack.c.l.b16 %v1852
  %v2429 = vunpack.c.l.b16 %v1853
  %v2430 = vunpack.c.l.b16 %v1854
  %v2431 = vunpack.c.l.b16 %v1855
  %v2432 = vpack.c.b16 %v2417, %v2416
  %v2433 = vpack.c.b16 %v2419, %v2418
  %v2434 = vpack.c.b16 %v2421, %v2420
  %v2435 = vpack.c.b16 %v2423, %v2422
  %v2436 = vpack.c.b16 %v2425, %v2424
  %v2437 = vpack.c.b16 %v2427, %v2426
  %v2438 = vpack.c.b16 %v2429, %v2428
  %v2439 = vpack.c.b16 %v2431, %v2430
  %2448 = vmatprep.subr.bf16.mxu0 0
  %2449 = vmatpush1.bf16.msra.mxu0 %v2432
  %2450 = vmatprep.subr.bf16.mxu0 0
  %2451 = vmatpush1.bf16.msra.mxu0 %v2433
  %2452 = vmatprep.subr.bf16.mxu0 0
  %2453 = vmatpush1.bf16.msra.mxu0 %v2434
  %2454 = vmatprep.subr.bf16.mxu0 0
  %2455 = vmatpush1.bf16.msra.mxu0 %v2435
  %2456 = vmatprep.subr.bf16.mxu0 0
  %2457 = vmatpush1.bf16.msra.mxu0 %v2436
  %2458 = vmatprep.subr.bf16.mxu0 0
  %2459 = vmatpush1.bf16.msra.mxu0 %v2437
  %2460 = vmatprep.subr.bf16.mxu0 0
  %2461 = vmatpush1.bf16.msra.mxu0 %v2438
  %2462 = vmatprep.subr.bf16.mxu0 0
  %2463 = vmatpush1.bf16.msra.mxu0 %v2439
  %2464 = vmatprep.subr.bf16.mxu0 0
  %2465 = vmatpush1.bf16.msra.mxu0 0
  %2466 = vmatprep.subr.bf16.mxu0 0
  %2467 = vmatpush1.bf16.msra.mxu0 0
  %2468 = vmatprep.subr.bf16.mxu0 0
  %2469 = vmatpush1.bf16.msra.mxu0 0
  %2470 = vmatprep.subr.bf16.mxu0 0
  %2471 = vmatpush1.bf16.msra.mxu0 0
  %2472 = vmatprep.subr.bf16.mxu0 0
  %2473 = vmatpush1.bf16.msra.mxu0 0
  %2474 = vmatprep.subr.bf16.mxu0 0
  %2475 = vmatpush1.bf16.msra.mxu0 0
  %2476 = vmatprep.subr.bf16.mxu0 0
  %2477 = vmatpush1.bf16.msra.mxu0 0
  %2478 = vmatprep.subr.bf16.mxu0 0
  %2479 = vmatpush1.bf16.msra.mxu0 0
  %2480 = vmatprep.mubr.bf16.mxu0 0
  %2481 = vmatmul.mubr.bf16.gmra.mrb[0].mxu0 %v1742
  %v2482 = vpop.f32.mrb[0].mxu0
  %v2483 = vadd.f32 0.0, %v2482
  %v2484 = vpop.f32.mrb[0].mxu0
  %v2485 = vpop.f32.mrb[0].mxu0
  %v2486 = vpop.f32.mrb[0].mxu0
  %2487 = vdwg.mxu0
  %v2504 = vunpack.c.l.b16 %v1856
  %v2505 = vunpack.c.l.b16 %v1857
  %v2506 = vunpack.c.l.b16 %v1858
  %v2507 = vunpack.c.l.b16 %v1859
  %v2508 = vunpack.c.l.b16 %v1860
  %v2509 = vunpack.c.l.b16 %v1861
  %v2510 = vunpack.c.l.b16 %v1862
  %v2511 = vunpack.c.l.b16 %v1863
  %v2512 = vunpack.c.l.b16 %v1864
  %v2513 = vunpack.c.l.b16 %v1865
  %v2514 = vunpack.c.l.b16 %v1866
  %v2515 = vunpack.c.l.b16 %v1867
  %v2516 = vunpack.c.l.b16 %v1868
  %v2517 = vunpack.c.l.b16 %v1869
  %v2518 = vunpack.c.l.b16 %v1870
  %v2519 = vunpack.c.l.b16 %v1871
  %v2520 = vpack.c.b16 %v2505, %v2504
  %v2521 = vpack.c.b16 %v2507, %v2506
  %v2522 = vpack.c.b16 %v2509, %v2508
  %v2523 = vpack.c.b16 %v2511, %v2510
  %v2524 = vpack.c.b16 %v2513, %v2512
  %v2525 = vpack.c.b16 %v2515, %v2514
  %v2526 = vpack.c.b16 %v2517, %v2516
  %v2527 = vpack.c.b16 %v2519, %v2518
  %2536 = vmatprep.subr.bf16.mxu0 0
  %2537 = vmatpush1.bf16.msra.mxu0 %v2520
  %2538 = vmatprep.subr.bf16.mxu0 0
  %2539 = vmatpush1.bf16.msra.mxu0 %v2521
  %2540 = vmatprep.subr.bf16.mxu0 0
  %2541 = vmatpush1.bf16.msra.mxu0 %v2522
  %2542 = vmatprep.subr.bf16.mxu0 0
  %2543 = vmatpush1.bf16.msra.mxu0 %v2523
  %2544 = vmatprep.subr.bf16.mxu0 0
  %2545 = vmatpush1.bf16.msra.mxu0 %v2524
  %2546 = vmatprep.subr.bf16.mxu0 0
  %2547 = vmatpush1.bf16.msra.mxu0 %v2525
  %2548 = vmatprep.subr.bf16.mxu0 0
  %2549 = vmatpush1.bf16.msra.mxu0 %v2526
  %2550 = vmatprep.subr.bf16.mxu0 0
  %2551 = vmatpush1.bf16.msra.mxu0 %v2527
  %2552 = vmatprep.subr.bf16.mxu0 0
  %2553 = vmatpush1.bf16.msra.mxu0 0
  %2554 = vmatprep.subr.bf16.mxu0 0
  %2555 = vmatpush1.bf16.msra.mxu0 0
  %2556 = vmatprep.subr.bf16.mxu0 0
  %2557 = vmatpush1.bf16.msra.mxu0 0
  %2558 = vmatprep.subr.bf16.mxu0 0
  %2559 = vmatpush1.bf16.msra.mxu0 0
  %2560 = vmatprep.subr.bf16.mxu0 0
  %2561 = vmatpush1.bf16.msra.mxu0 0
  %2562 = vmatprep.subr.bf16.mxu0 0
  %2563 = vmatpush1.bf16.msra.mxu0 0
  %2564 = vmatprep.subr.bf16.mxu0 0
  %2565 = vmatpush1.bf16.msra.mxu0 0
  %2566 = vmatprep.subr.bf16.mxu0 0
  %2567 = vmatpush1.bf16.msra.mxu0 0
  %2568 = vmatprep.mubr.bf16.mxu0 0
  %2569 = vmatmul.mubr.bf16.gmra.mrb[0].mxu0 %v1743
  %v2570 = vpop.f32.mrb[0].mxu0
  %v2571 = vadd.f32 0.0, %v2570
  %v2572 = vpop.f32.mrb[0].mxu0
  %v2573 = vpop.f32.mrb[0].mxu0
  %v2574 = vpop.f32.mrb[0].mxu0
  %2575 = vdwg.mxu0
  %v2576 = vsel %vm399, %v1955, 0.0
  %v2577 = vsel %vm399, %v2043, 0.0
  %v2578 = vadd.f32 %v2576, %v2577
  %v2579 = vsel %vm399, %v2131, 0.0
  %v2580 = vadd.f32 %v2578, %v2579
  %v2581 = vsel %vm399, %v2219, 0.0
  %v2582 = vadd.f32 %v2580, %v2581
  %v2583 = vsel %vm399, %v2307, 0.0
  %v2584 = vadd.f32 %v2582, %v2583
  %v2585 = vsel %vm399, %v2395, 0.0
  %v2586 = vadd.f32 %v2584, %v2585
  %v2587 = vsel %vm399, %v2483, 0.0
  %v2588 = vadd.f32 %v2586, %v2587
  %v2589 = vsel %vm399, %v2571, 0.0
  %v2590 = vadd.f32 %v2588, %v2589
  %v2591 = vld [vmem:[%s11] sm:$0x1]
  %v2593 = vlaneseq
  %v2594 = vshrl.u32 %v2593, 7
  %v2595 = vsub.s32 0, %v2594
  %v2596 = vrot.slane %v2591, %v2595
  %v2598 = vadd.f32 %v2590, %v2596
  %2599 = vst.msk [vmem:[%s12] sm:$0xff] %vm399, %v2598
  // Predicated region
  $region50: #{encoder_forward.1} parent=0 // pred_check
    _
  $region51: #{encoder_forward.1} parent=0 // pred_check_branch
    %2601 = sbr.rel (0) target = $region53
  $region52: #{encoder_forward.1} parent=0 // pred_region
    _
  $region53: #{encoder_forward.1} parent=0 // pred_fallthru
    _
  // Predicated region
  $region54: #{encoder_forward.1} parent=0 // pred_check
    _
  $region55: #{encoder_forward.1} parent=0 // pred_check_branch
    %2603 = sbr.rel (0) target = $region57
  $region56: #{encoder_forward.1} parent=0 // pred_region
    _
  $region57: #{encoder_forward.1} parent=0 // pred_fallthru
    _

</llo_original>
